<compile_context>
chip_gen: v7x
topology: tpu7x:2x2x1
jax: 0.10.0
libtpu: 0.0.40
codegen_flags: <defaults>
</compile_context>

<pallas_src>
import jax
import jax.numpy as jnp
from jax.experimental import pallas as pl
from jax.experimental.pallas import tpu as pltpu


def lstm_batched_kernel(x_ref, wih_ref, whh_ref, b_ref, wlin_ref, blin_ref,
                        out_ref):
    B = x_ref.shape[0]
    seq_len = x_ref.shape[1]
    Hp = whh_ref.shape[0]            # padded hidden size (128)

    wih = wih_ref[...]               # (1, 4*Hp) f32 (VPU operand)
    bias = b_ref[...]                # (1, 4*Hp) f32

    h = jnp.zeros((B, Hp), jnp.float32)   # register-carried state
    c = jnp.zeros((B, Hp), jnp.float32)

    # seq_len is static and small -> full unroll.  Each step: one fused bf16
    # (B,Hp)@(Hp,4*Hp) MXU matmul + vreg-resident VPU/EUP gate math.
    # TODO(synk): for seq_len >~ 32 switch to lax.fori_loop(..., unroll=8).
    for t in range(seq_len):
        # Input projection (contraction K=1): broadcast multiply on the VPU,
        # independent of h so it overlaps the recurrent MXU chain.
        x_t = x_ref[:, t:t + 1]                       # (B, 1)
        xw_t = x_t * wih + bias                       # (B, 4*Hp)

        # Fused recurrent matmul: bf16 operands, f32 accumulate.
        pre = (jnp.dot(h.astype(jnp.bfloat16), whh_ref[...],
                       preferred_element_type=jnp.float32)
               + xw_t)                                # (B, 4*Hp) f32

        # One EUP stream over the whole slab; tanh only on the g slice.
        sig = jax.nn.sigmoid(pre)
        i_g = sig[:, 0 * Hp:1 * Hp]
        f_g = sig[:, 1 * Hp:2 * Hp]
        o_g = sig[:, 3 * Hp:4 * Hp]
        g_g = jnp.tanh(pre[:, 2 * Hp:3 * Hp])

        c = f_g * c + i_g * g_g
        h = o_g * jnp.tanh(c)

    # Final linear (output_size == 1): VPU multiply + cross-lane reduce instead
    # of an N=1 MXU matmul on the tail of the critical path.
    out_ref[...] = (jnp.sum(h * wlin_ref[...], axis=-1, keepdims=True)
                    + blin_ref[...])


def lstm_model_forward(x, w_ih, w_hh, b, w_lin, b_lin, Hp=128):
    """Run the LSTM forward pass.

    x: (seq_len, input_size) single window, or (B, seq_len, input_size) batch
       of independent windows (each starting from zero hidden state).
    w_ih: (4, input_size, H), w_hh: (4, H, H), b: (4, H) [= b_ih + b_hh],
    w_lin: (H, output_size), b_lin: (1, output_size); gate order (i, f, g, o).
    Returns (output_size,) for a single window or (B, output_size) for a batch.
    """
    single = (x.ndim == 2)
    if single:
        x = x[None]
    B, seq_len, in_size = x.shape
    H = w_hh.shape[-1]
    out_size = w_lin.shape[-1]
    assert in_size == 1, "kernel specialized for input_size == 1 (as in LSTMModel)"
    assert out_size == 1, "kernel specialized for output_size == 1 (as in LSTMModel)"
    assert H <= Hp

    # Fuse the 4 gates into one lane-aligned (., 4*Hp) layout, zero-pad H->Hp.
    def fuse_pad_cols(w):
        K = w.shape[1]
        wp = jnp.zeros((K, 4 * Hp), jnp.float32)
        for g in range(4):
            wp = wp.at[:, g * Hp:g * Hp + H].set(w[g])
        return wp

    wih_f = fuse_pad_cols(w_ih)                                     # (1, 4*Hp) f32
    whh_f = jnp.zeros((Hp, 4 * Hp), jnp.float32)
    whh_f = whh_f.at[:H, :].set(fuse_pad_cols(w_hh))
    whh_bf = whh_f.astype(jnp.bfloat16)                             # MXU operand
    b_f = jnp.zeros((1, 4 * Hp), jnp.float32)
    for g in range(4):
        b_f = b_f.at[0, g * Hp:g * Hp + H].set(b[g])
    wlin_t = jnp.zeros((1, Hp), jnp.float32).at[0, :H].set(w_lin[:, 0])
    blin_f = b_lin.reshape(1, 1).astype(jnp.float32)

    # Pad batch to a sublane multiple (8) so (B, *) tiles are full vregs.
    Bp = max(8, ((B + 7) // 8) * 8)
    xb = jnp.zeros((Bp, seq_len), jnp.float32).at[:B].set(x[..., 0])

    vmem = pl.BlockSpec(memory_space=pltpu.MemorySpace.VMEM)
    out = pl.pallas_call(
        lstm_batched_kernel,
        out_shape=jax.ShapeDtypeStruct((Bp, 1), jnp.float32),
        in_specs=[vmem] * 6,
        out_specs=vmem,
    )(xb, wih_f, whh_bf, b_f, wlin_t, blin_f)
    # TODO(synk): for large window counts, add a leading "parallel" grid axis
    # over batch tiles (constant index_maps for the weights) so the two v7x
    # TensorCores each take half the batch.
    out = out[:B]
    return out[0] if single else out


def lstm_model_ref(x, w_ih, w_hh, b, w_lin, b_lin):
    """Pure-JAX f32 reference matching torch.nn.LSTM + Linear semantics."""
    H = w_hh.shape[-1]
    h = jnp.zeros((1, H), jnp.float32)
    c = jnp.zeros((1, H), jnp.float32)
    for t in range(x.shape[0]):
        xt = x[t:t + 1]
        pre = [xt @ w_ih[k] + h @ w_hh[k] + b[k] for k in range(4)]
        i_g = jax.nn.sigmoid(pre[0])
        f_g = jax.nn.sigmoid(pre[1])
        g_g = jnp.tanh(pre[2])
        o_g = jax.nn.sigmoid(pre[3])
        c = f_g * c + i_g * g_g
        h = o_g * jnp.tanh(c)
    return (h @ w_lin + b_lin)[0]


if __name__ == "__main__":
    input_size = 1
    hidden_layer_size = 100
    output_size = 1
    seq_len = 8
    batch = 8   # independent sliding windows batched into the MXU M dimension

    key = jax.random.PRNGKey(0)
    ks = jax.random.split(key, 8)
    bound = 1.0 / jnp.sqrt(hidden_layer_size)   # PyTorch default uniform bound

    # LSTM params, gate order (i, f, g, o), pre-split per gate.
    w_ih = jax.random.uniform(ks[0], (4, input_size, hidden_layer_size),
                              jnp.float32, -bound, bound)
    w_hh = jax.random.uniform(ks[1], (4, hidden_layer_size, hidden_layer_size),
                              jnp.float32, -bound, bound)
    b_ih = jax.random.uniform(ks[2], (4, hidden_layer_size),
                              jnp.float32, -bound, bound)
    b_hh = jax.random.uniform(ks[3], (4, hidden_layer_size),
                              jnp.float32, -bound, bound)
    b = b_ih + b_hh

    # Linear params.
    w_lin = jax.random.uniform(ks[4], (hidden_layer_size, output_size),
                               jnp.float32, -bound, bound)
    b_lin = jax.random.uniform(ks[5], (1, output_size),
                               jnp.float32, -bound, bound)

    # Batch of independent input sequences (batch, seq_len, input_size).
    x = jax.random.normal(ks[6], (batch, seq_len, input_size), jnp.float32)

    y = lstm_model_forward(x, w_ih, w_hh, b, w_lin, b_lin)
    y = jax.block_until_ready(y)
    assert y.shape == (batch, output_size)

    # bf16 MXU operands on the recurrence -> relaxed tolerance vs. pure-f32 ref.
    for i in range(batch):
        y_ref = lstm_model_ref(x[i], w_ih, w_hh, b, w_lin, b_lin)
        assert jnp.allclose(y[i], y_ref, rtol=2e-2, atol=2e-2), (i, y[i], y_ref)

    # Single-sequence path (== LSTMModel.forward(input_seq) -> predictions[-1]).
    y0 = lstm_model_forward(x[0], w_ih, w_hh, b, w_lin, b_lin)
    y0 = jax.block_until_ready(y0)
    assert y0.shape == (output_size,)
    assert jnp.allclose(y0, y[0], rtol=1e-5, atol=1e-5), (y0, y[0])

    print("KERNEL_OK")
</pallas_src>

<mosaic_0001>
module attributes {stable_mosaic.version = 11 : i64} {
  func.func @lstm_batched_kernel(%arg0: memref<8x8xf32, #tpu.memory_space<vmem>>, %arg1: memref<1x512xf32, #tpu.memory_space<vmem>>, %arg2: memref<128x512xbf16, #tpu.memory_space<vmem>>, %arg3: memref<1x512xf32, #tpu.memory_space<vmem>>, %arg4: memref<1x128xf32, #tpu.memory_space<vmem>>, %arg5: memref<1x1xf32, #tpu.memory_space<vmem>>, %arg6: memref<8x1xf32, #tpu.memory_space<vmem>>) attributes {dimension_semantics = [], scalar_prefetch = 0 : i64, scratch_operands = 0 : i64, tpu.core_type = #tpu.core_type<tc>} {
    %c0 = arith.constant 0 : index
    %c0_0 = arith.constant 0 : index
    %0 = vector.load %arg1[%c0, %c0_0] : memref<1x512xf32, #tpu.memory_space<vmem>>, vector<1x512xf32>
    %c0_1 = arith.constant 0 : index
    %c0_2 = arith.constant 0 : index
    %1 = vector.load %arg3[%c0_1, %c0_2] : memref<1x512xf32, #tpu.memory_space<vmem>>, vector<1x512xf32>
    %cst = arith.constant 0.000000e+00 : f32
    %2 = vector.broadcast %cst : f32 to vector<8x128xf32>
    %cst_3 = arith.constant 0.000000e+00 : f32
    %3 = vector.broadcast %cst_3 : f32 to vector<8x128xf32>
    %c0_4 = arith.constant 0 : index
    %c0_5 = arith.constant 0 : index
    %4 = vector.load %arg0[%c0_4, %c0_5] : memref<8x8xf32, #tpu.memory_space<vmem>>, vector<8x1xf32>
    %5 = vector.broadcast %4 : vector<8x1xf32> to vector<8x512xf32>
    %6 = vector.broadcast %0 : vector<1x512xf32> to vector<8x512xf32>
    %7 = arith.mulf %5, %6 : vector<8x512xf32>
    %8 = vector.broadcast %1 : vector<1x512xf32> to vector<8x512xf32>
    %9 = arith.addf %7, %8 : vector<8x512xf32>
    %10 = arith.truncf %2 : vector<8x128xf32> to vector<8x128xbf16>
    %c0_6 = arith.constant 0 : index
    %c0_7 = arith.constant 0 : index
    %11 = vector.load %arg2[%c0_6, %c0_7] : memref<128x512xbf16, #tpu.memory_space<vmem>>, vector<128x512xbf16>
    %cst_8 = arith.constant dense<0.000000e+00> : vector<8x512xf32>
    %12 = tpu.matmul %10, %11, %cst_8 {dimension_numbers = #tpu.dot_dimension_numbers<[1], [0], [0], [1], [0, 0, 1, 1], [], []>} : vector<8x128xbf16>, vector<128x512xbf16>, vector<8x512xf32> -> vector<8x512xf32>
    %13 = arith.addf %12, %9 : vector<8x512xf32>
    %14 = arith.negf %13 : vector<8x512xf32>
    %15 = math.exp %14 : vector<8x512xf32>
    %cst_9 = arith.constant 1.000000e+00 : f32
    %16 = vector.broadcast %cst_9 : f32 to vector<8x512xf32>
    %17 = arith.addf %16, %15 : vector<8x512xf32>
    %18 = arith.divf %16, %17 : vector<8x512xf32>
    %19 = vector.extract_strided_slice %18 {offsets = [0, 0], sizes = [8, 128], strides = [1, 1]} : vector<8x512xf32> to vector<8x128xf32>
    %20 = vector.extract_strided_slice %18 {offsets = [0, 128], sizes = [8, 128], strides = [1, 1]} : vector<8x512xf32> to vector<8x128xf32>
    %21 = vector.extract_strided_slice %18 {offsets = [0, 384], sizes = [8, 128], strides = [1, 1]} : vector<8x512xf32> to vector<8x128xf32>
    %22 = vector.extract_strided_slice %13 {offsets = [0, 256], sizes = [8, 128], strides = [1, 1]} : vector<8x512xf32> to vector<8x128xf32>
    %23 = math.tanh %22 : vector<8x128xf32>
    %24 = arith.mulf %20, %3 : vector<8x128xf32>
    %25 = arith.mulf %19, %23 : vector<8x128xf32>
    %26 = arith.addf %24, %25 : vector<8x128xf32>
    %27 = math.tanh %26 : vector<8x128xf32>
    %28 = arith.mulf %21, %27 : vector<8x128xf32>
    %c0_10 = arith.constant 0 : index
    %c1 = arith.constant 1 : index
    %29 = vector.load %arg0[%c0_10, %c1] : memref<8x8xf32, #tpu.memory_space<vmem>>, vector<8x1xf32>
    %30 = vector.broadcast %29 : vector<8x1xf32> to vector<8x512xf32>
    %31 = vector.broadcast %0 : vector<1x512xf32> to vector<8x512xf32>
    %32 = arith.mulf %30, %31 : vector<8x512xf32>
    %33 = vector.broadcast %1 : vector<1x512xf32> to vector<8x512xf32>
    %34 = arith.addf %32, %33 : vector<8x512xf32>
    %35 = arith.truncf %28 : vector<8x128xf32> to vector<8x128xbf16>
    %c0_11 = arith.constant 0 : index
    %c0_12 = arith.constant 0 : index
    %36 = vector.load %arg2[%c0_11, %c0_12] : memref<128x512xbf16, #tpu.memory_space<vmem>>, vector<128x512xbf16>
    %cst_13 = arith.constant dense<0.000000e+00> : vector<8x512xf32>
    %37 = tpu.matmul %35, %36, %cst_13 {dimension_numbers = #tpu.dot_dimension_numbers<[1], [0], [0], [1], [0, 0, 1, 1], [], []>} : vector<8x128xbf16>, vector<128x512xbf16>, vector<8x512xf32> -> vector<8x512xf32>
    %38 = arith.addf %37, %34 : vector<8x512xf32>
    %39 = arith.negf %38 : vector<8x512xf32>
    %40 = math.exp %39 : vector<8x512xf32>
    %cst_14 = arith.constant 1.000000e+00 : f32
    %41 = vector.broadcast %cst_14 : f32 to vector<8x512xf32>
    %42 = arith.addf %41, %40 : vector<8x512xf32>
    %43 = arith.divf %41, %42 : vector<8x512xf32>
    %44 = vector.extract_strided_slice %43 {offsets = [0, 0], sizes = [8, 128], strides = [1, 1]} : vector<8x512xf32> to vector<8x128xf32>
    %45 = vector.extract_strided_slice %43 {offsets = [0, 128], sizes = [8, 128], strides = [1, 1]} : vector<8x512xf32> to vector<8x128xf32>
    %46 = vector.extract_strided_slice %43 {offsets = [0, 384], sizes = [8, 128], strides = [1, 1]} : vector<8x512xf32> to vector<8x128xf32>
    %47 = vector.extract_strided_slice %38 {offsets = [0, 256], sizes = [8, 128], strides = [1, 1]} : vector<8x512xf32> to vector<8x128xf32>
    %48 = math.tanh %47 : vector<8x128xf32>
    %49 = arith.mulf %45, %26 : vector<8x128xf32>
    %50 = arith.mulf %44, %48 : vector<8x128xf32>
    %51 = arith.addf %49, %50 : vector<8x128xf32>
    %52 = math.tanh %51 : vector<8x128xf32>
    %53 = arith.mulf %46, %52 : vector<8x128xf32>
    %c0_15 = arith.constant 0 : index
    %c2 = arith.constant 2 : index
    %54 = vector.load %arg0[%c0_15, %c2] : memref<8x8xf32, #tpu.memory_space<vmem>>, vector<8x1xf32>
    %55 = vector.broadcast %54 : vector<8x1xf32> to vector<8x512xf32>
    %56 = vector.broadcast %0 : vector<1x512xf32> to vector<8x512xf32>
    %57 = arith.mulf %55, %56 : vector<8x512xf32>
    %58 = vector.broadcast %1 : vector<1x512xf32> to vector<8x512xf32>
    %59 = arith.addf %57, %58 : vector<8x512xf32>
    %60 = arith.truncf %53 : vector<8x128xf32> to vector<8x128xbf16>
    %c0_16 = arith.constant 0 : index
    %c0_17 = arith.constant 0 : index
    %61 = vector.load %arg2[%c0_16, %c0_17] : memref<128x512xbf16, #tpu.memory_space<vmem>>, vector<128x512xbf16>
    %cst_18 = arith.constant dense<0.000000e+00> : vector<8x512xf32>
    %62 = tpu.matmul %60, %61, %cst_18 {dimension_numbers = #tpu.dot_dimension_numbers<[1], [0], [0], [1], [0, 0, 1, 1], [], []>} : vector<8x128xbf16>, vector<128x512xbf16>, vector<8x512xf32> -> vector<8x512xf32>
    %63 = arith.addf %62, %59 : vector<8x512xf32>
    %64 = arith.negf %63 : vector<8x512xf32>
    %65 = math.exp %64 : vector<8x512xf32>
    %cst_19 = arith.constant 1.000000e+00 : f32
    %66 = vector.broadcast %cst_19 : f32 to vector<8x512xf32>
    %67 = arith.addf %66, %65 : vector<8x512xf32>
    %68 = arith.divf %66, %67 : vector<8x512xf32>
    %69 = vector.extract_strided_slice %68 {offsets = [0, 0], sizes = [8, 128], strides = [1, 1]} : vector<8x512xf32> to vector<8x128xf32>
    %70 = vector.extract_strided_slice %68 {offsets = [0, 128], sizes = [8, 128], strides = [1, 1]} : vector<8x512xf32> to vector<8x128xf32>
    %71 = vector.extract_strided_slice %68 {offsets = [0, 384], sizes = [8, 128], strides = [1, 1]} : vector<8x512xf32> to vector<8x128xf32>
    %72 = vector.extract_strided_slice %63 {offsets = [0, 256], sizes = [8, 128], strides = [1, 1]} : vector<8x512xf32> to vector<8x128xf32>
    %73 = math.tanh %72 : vector<8x128xf32>
    %74 = arith.mulf %70, %51 : vector<8x128xf32>
    %75 = arith.mulf %69, %73 : vector<8x128xf32>
    %76 = arith.addf %74, %75 : vector<8x128xf32>
    %77 = math.tanh %76 : vector<8x128xf32>
    %78 = arith.mulf %71, %77 : vector<8x128xf32>
    %c0_20 = arith.constant 0 : index
    %c3 = arith.constant 3 : index
    %79 = vector.load %arg0[%c0_20, %c3] : memref<8x8xf32, #tpu.memory_space<vmem>>, vector<8x1xf32>
    %80 = vector.broadcast %79 : vector<8x1xf32> to vector<8x512xf32>
    %81 = vector.broadcast %0 : vector<1x512xf32> to vector<8x512xf32>
    %82 = arith.mulf %80, %81 : vector<8x512xf32>
    %83 = vector.broadcast %1 : vector<1x512xf32> to vector<8x512xf32>
    %84 = arith.addf %82, %83 : vector<8x512xf32>
    %85 = arith.truncf %78 : vector<8x128xf32> to vector<8x128xbf16>
    %c0_21 = arith.constant 0 : index
    %c0_22 = arith.constant 0 : index
    %86 = vector.load %arg2[%c0_21, %c0_22] : memref<128x512xbf16, #tpu.memory_space<vmem>>, vector<128x512xbf16>
    %cst_23 = arith.constant dense<0.000000e+00> : vector<8x512xf32>
    %87 = tpu.matmul %85, %86, %cst_23 {dimension_numbers = #tpu.dot_dimension_numbers<[1], [0], [0], [1], [0, 0, 1, 1], [], []>} : vector<8x128xbf16>, vector<128x512xbf16>, vector<8x512xf32> -> vector<8x512xf32>
    %88 = arith.addf %87, %84 : vector<8x512xf32>
    %89 = arith.negf %88 : vector<8x512xf32>
    %90 = math.exp %89 : vector<8x512xf32>
    %cst_24 = arith.constant 1.000000e+00 : f32
    %91 = vector.broadcast %cst_24 : f32 to vector<8x512xf32>
    %92 = arith.addf %91, %90 : vector<8x512xf32>
    %93 = arith.divf %91, %92 : vector<8x512xf32>
    %94 = vector.extract_strided_slice %93 {offsets = [0, 0], sizes = [8, 128], strides = [1, 1]} : vector<8x512xf32> to vector<8x128xf32>
    %95 = vector.extract_strided_slice %93 {offsets = [0, 128], sizes = [8, 128], strides = [1, 1]} : vector<8x512xf32> to vector<8x128xf32>
    %96 = vector.extract_strided_slice %93 {offsets = [0, 384], sizes = [8, 128], strides = [1, 1]} : vector<8x512xf32> to vector<8x128xf32>
    %97 = vector.extract_strided_slice %88 {offsets = [0, 256], sizes = [8, 128], strides = [1, 1]} : vector<8x512xf32> to vector<8x128xf32>
    %98 = math.tanh %97 : vector<8x128xf32>
    %99 = arith.mulf %95, %76 : vector<8x128xf32>
    %100 = arith.mulf %94, %98 : vector<8x128xf32>
    %101 = arith.addf %99, %100 : vector<8x128xf32>
    %102 = math.tanh %101 : vector<8x128xf32>
    %103 = arith.mulf %96, %102 : vector<8x128xf32>
    %c0_25 = arith.constant 0 : index
    %c4 = arith.constant 4 : index
    %104 = vector.load %arg0[%c0_25, %c4] : memref<8x8xf32, #tpu.memory_space<vmem>>, vector<8x1xf32>
    %105 = vector.broadcast %104 : vector<8x1xf32> to vector<8x512xf32>
    %106 = vector.broadcast %0 : vector<1x512xf32> to vector<8x512xf32>
    %107 = arith.mulf %105, %106 : vector<8x512xf32>
    %108 = vector.broadcast %1 : vector<1x512xf32> to vector<8x512xf32>
    %109 = arith.addf %107, %108 : vector<8x512xf32>
    %110 = arith.truncf %103 : vector<8x128xf32> to vector<8x128xbf16>
    %c0_26 = arith.constant 0 : index
    %c0_27 = arith.constant 0 : index
    %111 = vector.load %arg2[%c0_26, %c0_27] : memref<128x512xbf16, #tpu.memory_space<vmem>>, vector<128x512xbf16>
    %cst_28 = arith.constant dense<0.000000e+00> : vector<8x512xf32>
    %112 = tpu.matmul %110, %111, %cst_28 {dimension_numbers = #tpu.dot_dimension_numbers<[1], [0], [0], [1], [0, 0, 1, 1], [], []>} : vector<8x128xbf16>, vector<128x512xbf16>, vector<8x512xf32> -> vector<8x512xf32>
    %113 = arith.addf %112, %109 : vector<8x512xf32>
    %114 = arith.negf %113 : vector<8x512xf32>
    %115 = math.exp %114 : vector<8x512xf32>
    %cst_29 = arith.constant 1.000000e+00 : f32
    %116 = vector.broadcast %cst_29 : f32 to vector<8x512xf32>
    %117 = arith.addf %116, %115 : vector<8x512xf32>
    %118 = arith.divf %116, %117 : vector<8x512xf32>
    %119 = vector.extract_strided_slice %118 {offsets = [0, 0], sizes = [8, 128], strides = [1, 1]} : vector<8x512xf32> to vector<8x128xf32>
    %120 = vector.extract_strided_slice %118 {offsets = [0, 128], sizes = [8, 128], strides = [1, 1]} : vector<8x512xf32> to vector<8x128xf32>
    %121 = vector.extract_strided_slice %118 {offsets = [0, 384], sizes = [8, 128], strides = [1, 1]} : vector<8x512xf32> to vector<8x128xf32>
    %122 = vector.extract_strided_slice %113 {offsets = [0, 256], sizes = [8, 128], strides = [1, 1]} : vector<8x512xf32> to vector<8x128xf32>
    %123 = math.tanh %122 : vector<8x128xf32>
    %124 = arith.mulf %120, %101 : vector<8x128xf32>
    %125 = arith.mulf %119, %123 : vector<8x128xf32>
    %126 = arith.addf %124, %125 : vector<8x128xf32>
    %127 = math.tanh %126 : vector<8x128xf32>
    %128 = arith.mulf %121, %127 : vector<8x128xf32>
    %c0_30 = arith.constant 0 : index
    %c5 = arith.constant 5 : index
    %129 = vector.load %arg0[%c0_30, %c5] : memref<8x8xf32, #tpu.memory_space<vmem>>, vector<8x1xf32>
    %130 = vector.broadcast %129 : vector<8x1xf32> to vector<8x512xf32>
    %131 = vector.broadcast %0 : vector<1x512xf32> to vector<8x512xf32>
    %132 = arith.mulf %130, %131 : vector<8x512xf32>
    %133 = vector.broadcast %1 : vector<1x512xf32> to vector<8x512xf32>
    %134 = arith.addf %132, %133 : vector<8x512xf32>
    %135 = arith.truncf %128 : vector<8x128xf32> to vector<8x128xbf16>
    %c0_31 = arith.constant 0 : index
    %c0_32 = arith.constant 0 : index
    %136 = vector.load %arg2[%c0_31, %c0_32] : memref<128x512xbf16, #tpu.memory_space<vmem>>, vector<128x512xbf16>
    %cst_33 = arith.constant dense<0.000000e+00> : vector<8x512xf32>
    %137 = tpu.matmul %135, %136, %cst_33 {dimension_numbers = #tpu.dot_dimension_numbers<[1], [0], [0], [1], [0, 0, 1, 1], [], []>} : vector<8x128xbf16>, vector<128x512xbf16>, vector<8x512xf32> -> vector<8x512xf32>
    %138 = arith.addf %137, %134 : vector<8x512xf32>
    %139 = arith.negf %138 : vector<8x512xf32>
    %140 = math.exp %139 : vector<8x512xf32>
    %cst_34 = arith.constant 1.000000e+00 : f32
    %141 = vector.broadcast %cst_34 : f32 to vector<8x512xf32>
    %142 = arith.addf %141, %140 : vector<8x512xf32>
    %143 = arith.divf %141, %142 : vector<8x512xf32>
    %144 = vector.extract_strided_slice %143 {offsets = [0, 0], sizes = [8, 128], strides = [1, 1]} : vector<8x512xf32> to vector<8x128xf32>
    %145 = vector.extract_strided_slice %143 {offsets = [0, 128], sizes = [8, 128], strides = [1, 1]} : vector<8x512xf32> to vector<8x128xf32>
    %146 = vector.extract_strided_slice %143 {offsets = [0, 384], sizes = [8, 128], strides = [1, 1]} : vector<8x512xf32> to vector<8x128xf32>
    %147 = vector.extract_strided_slice %138 {offsets = [0, 256], sizes = [8, 128], strides = [1, 1]} : vector<8x512xf32> to vector<8x128xf32>
    %148 = math.tanh %147 : vector<8x128xf32>
    %149 = arith.mulf %145, %126 : vector<8x128xf32>
    %150 = arith.mulf %144, %148 : vector<8x128xf32>
    %151 = arith.addf %149, %150 : vector<8x128xf32>
    %152 = math.tanh %151 : vector<8x128xf32>
    %153 = arith.mulf %146, %152 : vector<8x128xf32>
    %c0_35 = arith.constant 0 : index
    %c6 = arith.constant 6 : index
    %154 = vector.load %arg0[%c0_35, %c6] : memref<8x8xf32, #tpu.memory_space<vmem>>, vector<8x1xf32>
    %155 = vector.broadcast %154 : vector<8x1xf32> to vector<8x512xf32>
    %156 = vector.broadcast %0 : vector<1x512xf32> to vector<8x512xf32>
    %157 = arith.mulf %155, %156 : vector<8x512xf32>
    %158 = vector.broadcast %1 : vector<1x512xf32> to vector<8x512xf32>
    %159 = arith.addf %157, %158 : vector<8x512xf32>
    %160 = arith.truncf %153 : vector<8x128xf32> to vector<8x128xbf16>
    %c0_36 = arith.constant 0 : index
    %c0_37 = arith.constant 0 : index
    %161 = vector.load %arg2[%c0_36, %c0_37] : memref<128x512xbf16, #tpu.memory_space<vmem>>, vector<128x512xbf16>
    %cst_38 = arith.constant dense<0.000000e+00> : vector<8x512xf32>
    %162 = tpu.matmul %160, %161, %cst_38 {dimension_numbers = #tpu.dot_dimension_numbers<[1], [0], [0], [1], [0, 0, 1, 1], [], []>} : vector<8x128xbf16>, vector<128x512xbf16>, vector<8x512xf32> -> vector<8x512xf32>
    %163 = arith.addf %162, %159 : vector<8x512xf32>
    %164 = arith.negf %163 : vector<8x512xf32>
    %165 = math.exp %164 : vector<8x512xf32>
    %cst_39 = arith.constant 1.000000e+00 : f32
    %166 = vector.broadcast %cst_39 : f32 to vector<8x512xf32>
    %167 = arith.addf %166, %165 : vector<8x512xf32>
    %168 = arith.divf %166, %167 : vector<8x512xf32>
    %169 = vector.extract_strided_slice %168 {offsets = [0, 0], sizes = [8, 128], strides = [1, 1]} : vector<8x512xf32> to vector<8x128xf32>
    %170 = vector.extract_strided_slice %168 {offsets = [0, 128], sizes = [8, 128], strides = [1, 1]} : vector<8x512xf32> to vector<8x128xf32>
    %171 = vector.extract_strided_slice %168 {offsets = [0, 384], sizes = [8, 128], strides = [1, 1]} : vector<8x512xf32> to vector<8x128xf32>
    %172 = vector.extract_strided_slice %163 {offsets = [0, 256], sizes = [8, 128], strides = [1, 1]} : vector<8x512xf32> to vector<8x128xf32>
    %173 = math.tanh %172 : vector<8x128xf32>
    %174 = arith.mulf %170, %151 : vector<8x128xf32>
    %175 = arith.mulf %169, %173 : vector<8x128xf32>
    %176 = arith.addf %174, %175 : vector<8x128xf32>
    %177 = math.tanh %176 : vector<8x128xf32>
    %178 = arith.mulf %171, %177 : vector<8x128xf32>
    %c0_40 = arith.constant 0 : index
    %c7 = arith.constant 7 : index
    %179 = vector.load %arg0[%c0_40, %c7] : memref<8x8xf32, #tpu.memory_space<vmem>>, vector<8x1xf32>
    %180 = vector.broadcast %179 : vector<8x1xf32> to vector<8x512xf32>
    %181 = vector.broadcast %0 : vector<1x512xf32> to vector<8x512xf32>
    %182 = arith.mulf %180, %181 : vector<8x512xf32>
    %183 = vector.broadcast %1 : vector<1x512xf32> to vector<8x512xf32>
    %184 = arith.addf %182, %183 : vector<8x512xf32>
    %185 = arith.truncf %178 : vector<8x128xf32> to vector<8x128xbf16>
    %c0_41 = arith.constant 0 : index
    %c0_42 = arith.constant 0 : index
    %186 = vector.load %arg2[%c0_41, %c0_42] : memref<128x512xbf16, #tpu.memory_space<vmem>>, vector<128x512xbf16>
    %cst_43 = arith.constant dense<0.000000e+00> : vector<8x512xf32>
    %187 = tpu.matmul %185, %186, %cst_43 {dimension_numbers = #tpu.dot_dimension_numbers<[1], [0], [0], [1], [0, 0, 1, 1], [], []>} : vector<8x128xbf16>, vector<128x512xbf16>, vector<8x512xf32> -> vector<8x512xf32>
    %188 = arith.addf %187, %184 : vector<8x512xf32>
    %189 = arith.negf %188 : vector<8x512xf32>
    %190 = math.exp %189 : vector<8x512xf32>
    %cst_44 = arith.constant 1.000000e+00 : f32
    %191 = vector.broadcast %cst_44 : f32 to vector<8x512xf32>
    %192 = arith.addf %191, %190 : vector<8x512xf32>
    %193 = arith.divf %191, %192 : vector<8x512xf32>
    %194 = vector.extract_strided_slice %193 {offsets = [0, 0], sizes = [8, 128], strides = [1, 1]} : vector<8x512xf32> to vector<8x128xf32>
    %195 = vector.extract_strided_slice %193 {offsets = [0, 128], sizes = [8, 128], strides = [1, 1]} : vector<8x512xf32> to vector<8x128xf32>
    %196 = vector.extract_strided_slice %193 {offsets = [0, 384], sizes = [8, 128], strides = [1, 1]} : vector<8x512xf32> to vector<8x128xf32>
    %197 = vector.extract_strided_slice %188 {offsets = [0, 256], sizes = [8, 128], strides = [1, 1]} : vector<8x512xf32> to vector<8x128xf32>
    %198 = math.tanh %197 : vector<8x128xf32>
    %199 = arith.mulf %195, %176 : vector<8x128xf32>
    %200 = arith.mulf %194, %198 : vector<8x128xf32>
    %201 = arith.addf %199, %200 : vector<8x128xf32>
    %202 = math.tanh %201 : vector<8x128xf32>
    %203 = arith.mulf %196, %202 : vector<8x128xf32>
    %c0_45 = arith.constant 0 : index
    %c0_46 = arith.constant 0 : index
    %204 = vector.load %arg4[%c0_45, %c0_46] : memref<1x128xf32, #tpu.memory_space<vmem>>, vector<1x128xf32>
    %205 = vector.broadcast %204 : vector<1x128xf32> to vector<8x128xf32>
    %206 = arith.mulf %203, %205 : vector<8x128xf32>
    %cst_47 = arith.constant dense<0.000000e+00> : vector<8xf32>
    %207 = vector.multi_reduction <add>, %206, %cst_47 [1] : vector<8x128xf32> to vector<8xf32>
    %208 = vector.shape_cast %207 : vector<8xf32> to vector<8x1xf32>
    %c0_48 = arith.constant 0 : index
    %c0_49 = arith.constant 0 : index
    %209 = vector.load %arg5[%c0_48, %c0_49] : memref<1x1xf32, #tpu.memory_space<vmem>>, vector<1x1xf32>
    %210 = vector.broadcast %209 : vector<1x1xf32> to vector<8x1xf32>
    %211 = arith.addf %208, %210 : vector<8x1xf32>
    %c0_50 = arith.constant 0 : index
    %c0_51 = arith.constant 0 : index
    %212 = vector.load %arg6[%c0_50, %c0_51] : memref<8x1xf32, #tpu.memory_space<vmem>>, vector<8x1xf32>
    tpu.vector_store %arg6[%c0_50, %c0_51], %211 {strides = array<i32>} : memref<8x1xf32, #tpu.memory_space<vmem>>, vector<8x1xf32>,
    return
  }
}

</mosaic_0001>

<llo_original>
// kernel: tpu_custom_call.1
$region0: #{tpu_custom_call.1}
  #allocation0 [shape = 'u32[]', space=smem, size = 0x4, offset = 0x4, fixed_abs, tag = 'smem constant byte address 0x4 - core index']
  #allocation1 [shape = 'u32[144,128]{1,0:T(1,128)}', space=vmem, size = 0x12000, scoped, tag = 'internal scratch']
  #allocation2 [shape = 'f32[1,1]{1,0:T(1,128)S(1)}', space=vmem, size = 0x200, scoped, tag = 'scoped memory for tpu_custom_call.1']
  %s0 = inlined_call_operand.hbm [shape: f32[8,8], index: 0, kind: input, shape index: {}]
  %s1 = inlined_call_operand.vmem [shape: f32[1,512], index: 1, kind: input, shape index: {}]
  %s2 = inlined_call_operand.hbm [shape: bf16[128,512], index: 2, kind: input, shape index: {}]
  %s3 = inlined_call_operand.vmem [shape: f32[1,512], index: 3, kind: input, shape index: {}]
  %s4 = inlined_call_operand.vmem [shape: f32[1,128], index: 4, kind: input, shape index: {}]
  %s5 = inlined_call_operand.<no memory space> [shape: f32[1,1], index: 5, kind: input, shape index: {}]
  %s6 = inlined_call_operand.vmem [shape: f32[8,1], index: 6, kind: output, shape index: {}]
  %s7 = sld [smem:[#allocation0]]
  $region42: #{tpu_custom_call.1} parent=0
    _
  %s9 = ssub.s32 1, %s7
  %s10 = scalar_select 0, %s9, %s7
  %v11 = vstv %s5
  %12 = vst [vmem:[#allocation2] sm:$0x1] %v11
  $region1: #{tpu_custom_call.1} parent=0
    #allocation3 [shape = 'u8[4096]{0}', space=vmem, size = 0x1000, scoped, tag = 'input window, operand 0, single buffered']
    #allocation4 [shape = 's32[1]{0}', space=sflag, size = 0x4, scoped, tag = 'scoped memory for tpu_custom_call.1']
    #allocation5 [shape = 'u8[131072]{0}', space=vmem, size = 0x20000, scoped, tag = 'input window, operand 2, single buffered']
    #allocation6 [shape = 's32[1]{0}', space=sflag, size = 0x4, scoped, tag = 'scoped memory for tpu_custom_call.1']
    %13 = vsyncpa [#allocation4], 0
    %14 = vsyncpa [#allocation6], 0
    // Predicated region
    $region2: #{tpu_custom_call.1} parent=1 // pred_check
      _
    $region3: #{tpu_custom_call.1} parent=1 // pred_check_branch
      %16 = sbr.rel (0) target = $region5
    $region4: #{tpu_custom_call.1} parent=1 // pred_region
      %s18 = ssub.s32 128, 128
      %19 = vsyncadd [#allocation4], %s18
      %s21 = sshll.u32 [#allocation3], 4
      %s22 = int_to_ptr.vmem [resolvable:$true] %s21
      %24 = dma.hbm_to_vmem [thread:$0]  %s0, 128, %s22, [#allocation4]
    $region5: #{tpu_custom_call.1} parent=1 // pred_fallthru
      _
    // Predicated region
    $region6: #{tpu_custom_call.1} parent=1 // pred_check
      _
    $region7: #{tpu_custom_call.1} parent=1 // pred_check_branch
      %26 = sbr.rel (0) target = $region9
    $region8: #{tpu_custom_call.1} parent=1 // pred_region
      _
    $region9: #{tpu_custom_call.1} parent=1 // pred_fallthru
      _
    // Predicated region
    $region10: #{tpu_custom_call.1} parent=1 // pred_check
      _
    $region11: #{tpu_custom_call.1} parent=1 // pred_check_branch
      %28 = sbr.rel (0) target = $region13
    $region12: #{tpu_custom_call.1} parent=1 // pred_region
      %s30 = ssub.s32 4096, 4096
      %31 = vsyncadd [#allocation6], %s30
      %s32 = sshll.u32 [#allocation5], 4
      %s33 = int_to_ptr.vmem [resolvable:$true] %s32
      %38 = dma.hbm_to_vmem [thread:$0]  %s2, 4096, %s33, [#allocation6], 256, 256, 16
    $region13: #{tpu_custom_call.1} parent=1 // pred_fallthru
      _
    // Predicated region
    $region14: #{tpu_custom_call.1} parent=1 // pred_check
      _
    $region15: #{tpu_custom_call.1} parent=1 // pred_check_branch
      %40 = sbr.rel (0) target = $region17
    $region16: #{tpu_custom_call.1} parent=1 // pred_region
      _
    $region17: #{tpu_custom_call.1} parent=1 // pred_fallthru
      _
    // Predicated region
    $region18: #{tpu_custom_call.1} parent=1 // pred_check
      _
    $region19: #{tpu_custom_call.1} parent=1 // pred_check_branch
      %42 = sbr.rel (0) target = $region21
    $region20: #{tpu_custom_call.1} parent=1 // pred_region
      _
    $region21: #{tpu_custom_call.1} parent=1 // pred_fallthru
      _
    // Predicated region
    $region22: #{tpu_custom_call.1} parent=1 // pred_check
      _
    $region23: #{tpu_custom_call.1} parent=1 // pred_check_branch
      %44 = sbr.rel (0) target = $region25
    $region24: #{tpu_custom_call.1} parent=1 // pred_region
      _
    $region25: #{tpu_custom_call.1} parent=1 // pred_fallthru
      _
    // Predicated region
    $region26: #{tpu_custom_call.1} parent=1 // pred_check
      _
    $region27: #{tpu_custom_call.1} parent=1 // pred_check_branch
      %46 = sbr.rel (0) target = $region29
    $region28: #{tpu_custom_call.1} parent=1 // pred_region
      %47 = dma.done [#allocation4], 128
    $region29: #{tpu_custom_call.1} parent=1 // pred_fallthru
      _
    // Predicated region
    $region30: #{tpu_custom_call.1} parent=1 // pred_check
      _
    $region31: #{tpu_custom_call.1} parent=1 // pred_check_branch
      %49 = sbr.rel (0) target = $region33
    $region32: #{tpu_custom_call.1} parent=1 // pred_region
      %50 = dma.done [#allocation6], 4096
    $region33: #{tpu_custom_call.1} parent=1 // pred_fallthru
      _
    %v52 = vld [vmem:[%s1] sm:$0xf]
    %v53 = vld [vmem:[%s3] sm:$0xf]
    %v54 = vld [vmem:[#allocation3] sm:$0xff]
    %56 = vset.pattern.permute.xlu0 0
    %57 = vperm.xlu0 %56, %v54
    %v58 = vpop.permute.xlu0 %57
    %v61 = vlaneseq
    %v62 = vshrl.u32 %v61, 7
    %v63 = vsub.s32 0, %v62
    %v64 = vrot.slane %v52, %v63
    %v65 = vlaneseq
    %v66 = vshrl.u32 %v65, 7
    %v67 = vsub.s32 1, %v66
    %v68 = vrot.slane %v52, %v67
    %v69 = vlaneseq
    %v70 = vshrl.u32 %v69, 7
    %v71 = vsub.s32 2, %v70
    %v72 = vrot.slane %v52, %v71
    %v73 = vlaneseq
    %v74 = vshrl.u32 %v73, 7
    %v75 = vsub.s32 3, %v74
    %v76 = vrot.slane %v52, %v75
    %v81 = vmul.f32 %v58, %v64
    %v82 = vmul.f32 %v58, %v68
    %v83 = vmul.f32 %v58, %v72
    %v84 = vmul.f32 %v58, %v76
    %v86 = vlaneseq
    %v87 = vshrl.u32 %v86, 7
    %v88 = vsub.s32 0, %v87
    %v89 = vrot.slane %v53, %v88
    %v90 = vlaneseq
    %v91 = vshrl.u32 %v90, 7
    %v92 = vsub.s32 1, %v91
    %v93 = vrot.slane %v53, %v92
    %v94 = vlaneseq
    %v95 = vshrl.u32 %v94, 7
    %v96 = vsub.s32 2, %v95
    %v97 = vrot.slane %v53, %v96
    %v98 = vlaneseq
    %v99 = vshrl.u32 %v98, 7
    %v100 = vsub.s32 3, %v99
    %v101 = vrot.slane %v53, %v100
    %v106 = vadd.f32 %v81, %v89
    %v107 = vadd.f32 %v82, %v93
    %v108 = vadd.f32 %v83, %v97
    %v109 = vadd.f32 %v84, %v101
    %v110 = vld [vmem:[#allocation5] sm:$0xff]
    %v111 = vld [vmem:[#allocation5 + $0x8] sm:$0xff]
    %v112 = vld [vmem:[#allocation5 + $0x10] sm:$0xff]
    %v113 = vld [vmem:[#allocation5 + $0x18] sm:$0xff]
    %v114 = vld [vmem:[#allocation5 + $0x20] sm:$0xff]
    %v115 = vld [vmem:[#allocation5 + $0x28] sm:$0xff]
    %v116 = vld [vmem:[#allocation5 + $0x30] sm:$0xff]
    %v117 = vld [vmem:[#allocation5 + $0x38] sm:$0xff]
    %v118 = vld [vmem:[#allocation5 + $0x40] sm:$0xff]
    %v119 = vld [vmem:[#allocation5 + $0x48] sm:$0xff]
    %v120 = vld [vmem:[#allocation5 + $0x50] sm:$0xff]
    %v121 = vld [vmem:[#allocation5 + $0x58] sm:$0xff]
    %v122 = vld [vmem:[#allocation5 + $0x60] sm:$0xff]
    %v123 = vld [vmem:[#allocation5 + $0x68] sm:$0xff]
    %v124 = vld [vmem:[#allocation5 + $0x70] sm:$0xff]
    %v125 = vld [vmem:[#allocation5 + $0x78] sm:$0xff]
    %v126 = vld [vmem:[#allocation5 + $0x80] sm:$0xff]
    %v127 = vld [vmem:[#allocation5 + $0x88] sm:$0xff]
    %v128 = vld [vmem:[#allocation5 + $0x90] sm:$0xff]
    %v129 = vld [vmem:[#allocation5 + $0x98] sm:$0xff]
    %v130 = vld [vmem:[#allocation5 + $0xa0] sm:$0xff]
    %v131 = vld [vmem:[#allocation5 + $0xa8] sm:$0xff]
    %v132 = vld [vmem:[#allocation5 + $0xb0] sm:$0xff]
    %v133 = vld [vmem:[#allocation5 + $0xb8] sm:$0xff]
    %v134 = vld [vmem:[#allocation5 + $0xc0] sm:$0xff]
    %v135 = vld [vmem:[#allocation5 + $0xc8] sm:$0xff]
    %v136 = vld [vmem:[#allocation5 + $0xd0] sm:$0xff]
    %v137 = vld [vmem:[#allocation5 + $0xd8] sm:$0xff]
    %v138 = vld [vmem:[#allocation5 + $0xe0] sm:$0xff]
    %v139 = vld [vmem:[#allocation5 + $0xe8] sm:$0xff]
    %v140 = vld [vmem:[#allocation5 + $0xf0] sm:$0xff]
    %v141 = vld [vmem:[#allocation5 + $0xf8] sm:$0xff]
    %v174 = vunpack.c.l.b16 %v110
    %v175 = vunpack.c.h.b16 %v110
    %v176 = vunpack.c.l.b16 %v111
    %v177 = vunpack.c.h.b16 %v111
    %v178 = vunpack.c.l.b16 %v112
    %v179 = vunpack.c.h.b16 %v112
    %v180 = vunpack.c.l.b16 %v113
    %v181 = vunpack.c.h.b16 %v113
    %v182 = vunpack.c.l.b16 %v114
    %v183 = vunpack.c.h.b16 %v114
    %v184 = vunpack.c.l.b16 %v115
    %v185 = vunpack.c.h.b16 %v115
    %v186 = vunpack.c.l.b16 %v116
    %v187 = vunpack.c.h.b16 %v116
    %v188 = vunpack.c.l.b16 %v117
    %v189 = vunpack.c.h.b16 %v117
    %v190 = vunpack.c.l.b16 %v118
    %v191 = vunpack.c.h.b16 %v118
    %v192 = vunpack.c.l.b16 %v119
    %v193 = vunpack.c.h.b16 %v119
    %v194 = vunpack.c.l.b16 %v120
    %v195 = vunpack.c.h.b16 %v120
    %v196 = vunpack.c.l.b16 %v121
    %v197 = vunpack.c.h.b16 %v121
    %v198 = vunpack.c.l.b16 %v122
    %v199 = vunpack.c.h.b16 %v122
    %v200 = vunpack.c.l.b16 %v123
    %v201 = vunpack.c.h.b16 %v123
    %v202 = vunpack.c.l.b16 %v124
    %v203 = vunpack.c.h.b16 %v124
    %v204 = vunpack.c.l.b16 %v125
    %v205 = vunpack.c.h.b16 %v125
    %v206 = vunpack.c.l.b16 %v126
    %v207 = vunpack.c.h.b16 %v126
    %v208 = vunpack.c.l.b16 %v127
    %v209 = vunpack.c.h.b16 %v127
    %v210 = vunpack.c.l.b16 %v128
    %v211 = vunpack.c.h.b16 %v128
    %v212 = vunpack.c.l.b16 %v129
    %v213 = vunpack.c.h.b16 %v129
    %v214 = vunpack.c.l.b16 %v130
    %v215 = vunpack.c.h.b16 %v130
    %v216 = vunpack.c.l.b16 %v131
    %v217 = vunpack.c.h.b16 %v131
    %v218 = vunpack.c.l.b16 %v132
    %v219 = vunpack.c.h.b16 %v132
    %v220 = vunpack.c.l.b16 %v133
    %v221 = vunpack.c.h.b16 %v133
    %v222 = vunpack.c.l.b16 %v134
    %v223 = vunpack.c.h.b16 %v134
    %v224 = vunpack.c.l.b16 %v135
    %v225 = vunpack.c.h.b16 %v135
    %v226 = vunpack.c.l.b16 %v136
    %v227 = vunpack.c.h.b16 %v136
    %v228 = vunpack.c.l.b16 %v137
    %v229 = vunpack.c.h.b16 %v137
    %v230 = vunpack.c.l.b16 %v138
    %v231 = vunpack.c.h.b16 %v138
    %v232 = vunpack.c.l.b16 %v139
    %v233 = vunpack.c.h.b16 %v139
    %v234 = vunpack.c.l.b16 %v140
    %v235 = vunpack.c.h.b16 %v140
    %v236 = vunpack.c.l.b16 %v141
    %v237 = vunpack.c.h.b16 %v141
    %v238 = vpack.c.b16 %v178, %v174
    %v239 = vpack.c.b16 %v179, %v175
    %v240 = vpack.c.b16 %v180, %v176
    %v241 = vpack.c.b16 %v181, %v177
    %v242 = vpack.c.b16 %v186, %v182
    %v243 = vpack.c.b16 %v187, %v183
    %v244 = vpack.c.b16 %v188, %v184
    %v245 = vpack.c.b16 %v189, %v185
    %v246 = vpack.c.b16 %v194, %v190
    %v247 = vpack.c.b16 %v195, %v191
    %v248 = vpack.c.b16 %v196, %v192
    %v249 = vpack.c.b16 %v197, %v193
    %v250 = vpack.c.b16 %v202, %v198
    %v251 = vpack.c.b16 %v203, %v199
    %v252 = vpack.c.b16 %v204, %v200
    %v253 = vpack.c.b16 %v205, %v201
    %v254 = vpack.c.b16 %v210, %v206
    %v255 = vpack.c.b16 %v211, %v207
    %v256 = vpack.c.b16 %v212, %v208
    %v257 = vpack.c.b16 %v213, %v209
    %v258 = vpack.c.b16 %v218, %v214
    %v259 = vpack.c.b16 %v219, %v215
    %v260 = vpack.c.b16 %v220, %v216
    %v261 = vpack.c.b16 %v221, %v217
    %v262 = vpack.c.b16 %v226, %v222
    %v263 = vpack.c.b16 %v227, %v223
    %v264 = vpack.c.b16 %v228, %v224
    %v265 = vpack.c.b16 %v229, %v225
    %v266 = vpack.c.b16 %v234, %v230
    %v267 = vpack.c.b16 %v235, %v231
    %v268 = vpack.c.b16 %v236, %v232
    %v269 = vpack.c.b16 %v237, %v233
    %302 = vmatprep.subr.bf16.mxu0 %v239
    %303 = vmatpush1.bf16.msra.mxu0 %v238
    %304 = vmatprep.subr.bf16.mxu0 %v243
    %305 = vmatpush1.bf16.msra.mxu0 %v242
    %306 = vmatprep.subr.bf16.mxu0 %v247
    %307 = vmatpush1.bf16.msra.mxu0 %v246
    %308 = vmatprep.subr.bf16.mxu0 %v251
    %309 = vmatpush1.bf16.msra.mxu0 %v250
    %310 = vmatprep.subr.bf16.mxu0 %v255
    %311 = vmatpush1.bf16.msra.mxu0 %v254
    %312 = vmatprep.subr.bf16.mxu0 %v259
    %313 = vmatpush1.bf16.msra.mxu0 %v258
    %314 = vmatprep.subr.bf16.mxu0 %v263
    %315 = vmatpush1.bf16.msra.mxu0 %v262
    %316 = vmatprep.subr.bf16.mxu0 %v267
    %317 = vmatpush1.bf16.msra.mxu0 %v266
    %318 = vmatprep.subr.bf16.mxu0 0
    %319 = vmatpush1.bf16.msra.mxu0 0
    %320 = vmatprep.subr.bf16.mxu0 0
    %321 = vmatpush1.bf16.msra.mxu0 0
    %322 = vmatprep.subr.bf16.mxu0 0
    %323 = vmatpush1.bf16.msra.mxu0 0
    %324 = vmatprep.subr.bf16.mxu0 0
    %325 = vmatpush1.bf16.msra.mxu0 0
    %326 = vmatprep.subr.bf16.mxu0 0
    %327 = vmatpush1.bf16.msra.mxu0 0
    %328 = vmatprep.subr.bf16.mxu0 0
    %329 = vmatpush1.bf16.msra.mxu0 0
    %330 = vmatprep.subr.bf16.mxu0 0
    %331 = vmatpush1.bf16.msra.mxu0 0
    %332 = vmatprep.subr.bf16.mxu0 0
    %333 = vmatpush1.bf16.msra.mxu0 0
    %334 = vmatprep.mubr.bf16.mxu0 0
    %335 = vmatmul.mubr.bf16.gmra.mrb[0].mxu0 0
    %v336 = vpop.f32.mrb[0].mxu0
    %v337 = vadd.f32 %v106, %v336
    %v338 = vpop.f32.mrb[0].mxu0
    %v339 = vadd.f32 %v107, %v338
    %v340 = vpop.f32.mrb[0].mxu0
    %v341 = vpop.f32.mrb[0].mxu0
    %342 = vdwg.mxu0
    %343 = vmatprep.subr.bf16.mxu0 %v241
    %344 = vmatpush1.bf16.msra.mxu0 %v240
    %345 = vmatprep.subr.bf16.mxu0 %v245
    %346 = vmatpush1.bf16.msra.mxu0 %v244
    %347 = vmatprep.subr.bf16.mxu0 %v249
    %348 = vmatpush1.bf16.msra.mxu0 %v248
    %349 = vmatprep.subr.bf16.mxu0 %v253
    %350 = vmatpush1.bf16.msra.mxu0 %v252
    %351 = vmatprep.subr.bf16.mxu0 %v257
    %352 = vmatpush1.bf16.msra.mxu0 %v256
    %353 = vmatprep.subr.bf16.mxu0 %v261
    %354 = vmatpush1.bf16.msra.mxu0 %v260
    %355 = vmatprep.subr.bf16.mxu0 %v265
    %356 = vmatpush1.bf16.msra.mxu0 %v264
    %357 = vmatprep.subr.bf16.mxu0 %v269
    %358 = vmatpush1.bf16.msra.mxu0 %v268
    %359 = vmatprep.subr.bf16.mxu0 0
    %360 = vmatpush1.bf16.msra.mxu0 0
    %361 = vmatprep.subr.bf16.mxu0 0
    %362 = vmatpush1.bf16.msra.mxu0 0
    %363 = vmatprep.subr.bf16.mxu0 0
    %364 = vmatpush1.bf16.msra.mxu0 0
    %365 = vmatprep.subr.bf16.mxu0 0
    %366 = vmatpush1.bf16.msra.mxu0 0
    %367 = vmatprep.subr.bf16.mxu0 0
    %368 = vmatpush1.bf16.msra.mxu0 0
    %369 = vmatprep.subr.bf16.mxu0 0
    %370 = vmatpush1.bf16.msra.mxu0 0
    %371 = vmatprep.subr.bf16.mxu0 0
    %372 = vmatpush1.bf16.msra.mxu0 0
    %373 = vmatprep.subr.bf16.mxu0 0
    %374 = vmatpush1.bf16.msra.mxu0 0
    %375 = vmatprep.mubr.bf16.mxu0 0
    %376 = vmatmul.mubr.bf16.gmra.mrb[0].mxu0 0
    %v377 = vpop.f32.mrb[0].mxu0
    %v378 = vadd.f32 %v108, %v377
    %v379 = vpop.f32.mrb[0].mxu0
    %v380 = vadd.f32 %v109, %v379
    %v381 = vpop.f32.mrb[0].mxu0
    %v382 = vpop.f32.mrb[0].mxu0
    %383 = vdwg.mxu0
    %v384 = vxor.u32 %v337, 2147483648
    %v385 = vxor.u32 %v339, 2147483648
    %v386 = vxor.u32 %v380, 2147483648
    %v387 = vmul.f32 %v384, 1.442695
    %v388 = vpow.pop %v387
    %v389 = vmul.f32 %v385, 1.442695
    %v390 = vpow.pop %v389
    %v391 = vmul.f32 %v386, 1.442695
    %v392 = vpow.pop %v391
    %v393 = vadd.f32 %v388, 1.0
    %v394 = vadd.f32 %v390, 1.0
    %v395 = vadd.f32 %v392, 1.0
    %v396 = vrcp.pop %v393
    %v397 = vmul.f32 1.0, %v396
    %v398 = vrcp.pop %v394
    %v399 = vmul.f32 1.0, %v398
    %v400 = vrcp.pop %v395
    %v401 = vmul.f32 1.0, %v400
    %v402 = vtanh.pop %v378
    %v403 = vmul.f32 %v399, 0.0
    %v404 = vmul.f32 %v397, %v402
    %v405 = vadd.f32 %v403, %v404
    %v406 = vtanh.pop %v405
    %v407 = vmul.f32 %v401, %v406
    %408 = vset.pattern.permute.xlu0 1
    %409 = vperm.xlu0 %408, %v54
    %v410 = vpop.permute.xlu0 %409
    %v412 = vmul.f32 %v410, %v64
    %v413 = vmul.f32 %v410, %v68
    %v414 = vmul.f32 %v410, %v72
    %v415 = vmul.f32 %v410, %v76
    %v416 = vadd.f32 %v412, %v89
    %v417 = vadd.f32 %v413, %v93
    %v418 = vadd.f32 %v414, %v97
    %v419 = vadd.f32 %v415, %v101
    %v420 = vpack.c.bf16 %v407, %v407
    %421 = vmatprep.subr.bf16.mxu0 %v239
    %422 = vmatpush1.bf16.msra.mxu0 %v238
    %423 = vmatprep.subr.bf16.mxu0 %v243
    %424 = vmatpush1.bf16.msra.mxu0 %v242
    %425 = vmatprep.subr.bf16.mxu0 %v247
    %426 = vmatpush1.bf16.msra.mxu0 %v246
    %427 = vmatprep.subr.bf16.mxu0 %v251
    %428 = vmatpush1.bf16.msra.mxu0 %v250
    %429 = vmatprep.subr.bf16.mxu0 %v255
    %430 = vmatpush1.bf16.msra.mxu0 %v254
    %431 = vmatprep.subr.bf16.mxu0 %v259
    %432 = vmatpush1.bf16.msra.mxu0 %v258
    %433 = vmatprep.subr.bf16.mxu0 %v263
    %434 = vmatpush1.bf16.msra.mxu0 %v262
    %435 = vmatprep.subr.bf16.mxu0 %v267
    %436 = vmatpush1.bf16.msra.mxu0 %v266
    %437 = vmatprep.subr.bf16.mxu0 0
    %438 = vmatpush1.bf16.msra.mxu0 0
    %439 = vmatprep.subr.bf16.mxu0 0
    %440 = vmatpush1.bf16.msra.mxu0 0
    %441 = vmatprep.subr.bf16.mxu0 0
    %442 = vmatpush1.bf16.msra.mxu0 0
    %443 = vmatprep.subr.bf16.mxu0 0
    %444 = vmatpush1.bf16.msra.mxu0 0
    %445 = vmatprep.subr.bf16.mxu0 0
    %446 = vmatpush1.bf16.msra.mxu0 0
    %447 = vmatprep.subr.bf16.mxu0 0
    %448 = vmatpush1.bf16.msra.mxu0 0
    %449 = vmatprep.subr.bf16.mxu0 0
    %450 = vmatpush1.bf16.msra.mxu0 0
    %451 = vmatprep.subr.bf16.mxu0 0
    %452 = vmatpush1.bf16.msra.mxu0 0
    %453 = vmatprep.mubr.bf16.mxu0 0
    %454 = vmatmul.mubr.bf16.gmra.mrb[0].mxu0 %v420
    %v455 = vpop.f32.mrb[0].mxu0
    %v456 = vadd.f32 %v416, %v455
    %v457 = vpop.f32.mrb[0].mxu0
    %v458 = vadd.f32 %v417, %v457
    %v459 = vpop.f32.mrb[0].mxu0
    %v460 = vpop.f32.mrb[0].mxu0
    %461 = vdwg.mxu0
    %462 = vmatprep.subr.bf16.mxu0 %v241
    %463 = vmatpush1.bf16.msra.mxu0 %v240
    %464 = vmatprep.subr.bf16.mxu0 %v245
    %465 = vmatpush1.bf16.msra.mxu0 %v244
    %466 = vmatprep.subr.bf16.mxu0 %v249
    %467 = vmatpush1.bf16.msra.mxu0 %v248
    %468 = vmatprep.subr.bf16.mxu0 %v253
    %469 = vmatpush1.bf16.msra.mxu0 %v252
    %470 = vmatprep.subr.bf16.mxu0 %v257
    %471 = vmatpush1.bf16.msra.mxu0 %v256
    %472 = vmatprep.subr.bf16.mxu0 %v261
    %473 = vmatpush1.bf16.msra.mxu0 %v260
    %474 = vmatprep.subr.bf16.mxu0 %v265
    %475 = vmatpush1.bf16.msra.mxu0 %v264
    %476 = vmatprep.subr.bf16.mxu0 %v269
    %477 = vmatpush1.bf16.msra.mxu0 %v268
    %478 = vmatprep.subr.bf16.mxu0 0
    %479 = vmatpush1.bf16.msra.mxu0 0
    %480 = vmatprep.subr.bf16.mxu0 0
    %481 = vmatpush1.bf16.msra.mxu0 0
    %482 = vmatprep.subr.bf16.mxu0 0
    %483 = vmatpush1.bf16.msra.mxu0 0
    %484 = vmatprep.subr.bf16.mxu0 0
    %485 = vmatpush1.bf16.msra.mxu0 0
    %486 = vmatprep.subr.bf16.mxu0 0
    %487 = vmatpush1.bf16.msra.mxu0 0
    %488 = vmatprep.subr.bf16.mxu0 0
    %489 = vmatpush1.bf16.msra.mxu0 0
    %490 = vmatprep.subr.bf16.mxu0 0
    %491 = vmatpush1.bf16.msra.mxu0 0
    %492 = vmatprep.subr.bf16.mxu0 0
    %493 = vmatpush1.bf16.msra.mxu0 0
    %494 = vmatprep.mubr.bf16.mxu0 0
    %495 = vmatmul.mubr.bf16.gmra.mrb[0].mxu0 %v420
    %v496 = vpop.f32.mrb[0].mxu0
    %v497 = vadd.f32 %v418, %v496
    %v498 = vpop.f32.mrb[0].mxu0
    %v499 = vadd.f32 %v419, %v498
    %v500 = vpop.f32.mrb[0].mxu0
    %v501 = vpop.f32.mrb[0].mxu0
    %502 = vdwg.mxu0
    %v503 = vxor.u32 %v456, 2147483648
    %v504 = vxor.u32 %v458, 2147483648
    %v505 = vxor.u32 %v499, 2147483648
    %v506 = vmul.f32 %v503, 1.442695
    %v507 = vpow.pop %v506
    %v508 = vmul.f32 %v504, 1.442695
    %v509 = vpow.pop %v508
    %v510 = vmul.f32 %v505, 1.442695
    %v511 = vpow.pop %v510
    %v512 = vadd.f32 %v507, 1.0
    %v513 = vadd.f32 %v509, 1.0
    %v514 = vadd.f32 %v511, 1.0
    %v515 = vrcp.pop %v512
    %v516 = vmul.f32 1.0, %v515
    %v517 = vrcp.pop %v513
    %v518 = vmul.f32 1.0, %v517
    %v519 = vrcp.pop %v514
    %v520 = vmul.f32 1.0, %v519
    %v521 = vtanh.pop %v497
    %v522 = vmul.f32 %v518, %v405
    %v523 = vmul.f32 %v516, %v521
    %v524 = vadd.f32 %v522, %v523
    %v525 = vtanh.pop %v524
    %v526 = vmul.f32 %v520, %v525
    %527 = vset.pattern.permute.xlu0 2
    %528 = vperm.xlu0 %527, %v54
    %v529 = vpop.permute.xlu0 %528
    %v531 = vmul.f32 %v529, %v64
    %v532 = vmul.f32 %v529, %v68
    %v533 = vmul.f32 %v529, %v72
    %v534 = vmul.f32 %v529, %v76
    %v535 = vadd.f32 %v531, %v89
    %v536 = vadd.f32 %v532, %v93
    %v537 = vadd.f32 %v533, %v97
    %v538 = vadd.f32 %v534, %v101
    %v539 = vpack.c.bf16 %v526, %v526
    %540 = vmatprep.subr.bf16.mxu0 %v239
    %541 = vmatpush1.bf16.msra.mxu0 %v238
    %542 = vmatprep.subr.bf16.mxu0 %v243
    %543 = vmatpush1.bf16.msra.mxu0 %v242
    %544 = vmatprep.subr.bf16.mxu0 %v247
    %545 = vmatpush1.bf16.msra.mxu0 %v246
    %546 = vmatprep.subr.bf16.mxu0 %v251
    %547 = vmatpush1.bf16.msra.mxu0 %v250
    %548 = vmatprep.subr.bf16.mxu0 %v255
    %549 = vmatpush1.bf16.msra.mxu0 %v254
    %550 = vmatprep.subr.bf16.mxu0 %v259
    %551 = vmatpush1.bf16.msra.mxu0 %v258
    %552 = vmatprep.subr.bf16.mxu0 %v263
    %553 = vmatpush1.bf16.msra.mxu0 %v262
    %554 = vmatprep.subr.bf16.mxu0 %v267
    %555 = vmatpush1.bf16.msra.mxu0 %v266
    %556 = vmatprep.subr.bf16.mxu0 0
    %557 = vmatpush1.bf16.msra.mxu0 0
    %558 = vmatprep.subr.bf16.mxu0 0
    %559 = vmatpush1.bf16.msra.mxu0 0
    %560 = vmatprep.subr.bf16.mxu0 0
    %561 = vmatpush1.bf16.msra.mxu0 0
    %562 = vmatprep.subr.bf16.mxu0 0
    %563 = vmatpush1.bf16.msra.mxu0 0
    %564 = vmatprep.subr.bf16.mxu0 0
    %565 = vmatpush1.bf16.msra.mxu0 0
    %566 = vmatprep.subr.bf16.mxu0 0
    %567 = vmatpush1.bf16.msra.mxu0 0
    %568 = vmatprep.subr.bf16.mxu0 0
    %569 = vmatpush1.bf16.msra.mxu0 0
    %570 = vmatprep.subr.bf16.mxu0 0
    %571 = vmatpush1.bf16.msra.mxu0 0
    %572 = vmatprep.mubr.bf16.mxu0 0
    %573 = vmatmul.mubr.bf16.gmra.mrb[0].mxu0 %v539
    %v574 = vpop.f32.mrb[0].mxu0
    %v575 = vadd.f32 %v535, %v574
    %v576 = vpop.f32.mrb[0].mxu0
    %v577 = vadd.f32 %v536, %v576
    %v578 = vpop.f32.mrb[0].mxu0
    %v579 = vpop.f32.mrb[0].mxu0
    %580 = vdwg.mxu0
    %581 = vmatprep.subr.bf16.mxu0 %v241
    %582 = vmatpush1.bf16.msra.mxu0 %v240
    %583 = vmatprep.subr.bf16.mxu0 %v245
    %584 = vmatpush1.bf16.msra.mxu0 %v244
    %585 = vmatprep.subr.bf16.mxu0 %v249
    %586 = vmatpush1.bf16.msra.mxu0 %v248
    %587 = vmatprep.subr.bf16.mxu0 %v253
    %588 = vmatpush1.bf16.msra.mxu0 %v252
    %589 = vmatprep.subr.bf16.mxu0 %v257
    %590 = vmatpush1.bf16.msra.mxu0 %v256
    %591 = vmatprep.subr.bf16.mxu0 %v261
    %592 = vmatpush1.bf16.msra.mxu0 %v260
    %593 = vmatprep.subr.bf16.mxu0 %v265
    %594 = vmatpush1.bf16.msra.mxu0 %v264
    %595 = vmatprep.subr.bf16.mxu0 %v269
    %596 = vmatpush1.bf16.msra.mxu0 %v268
    %597 = vmatprep.subr.bf16.mxu0 0
    %598 = vmatpush1.bf16.msra.mxu0 0
    %599 = vmatprep.subr.bf16.mxu0 0
    %600 = vmatpush1.bf16.msra.mxu0 0
    %601 = vmatprep.subr.bf16.mxu0 0
    %602 = vmatpush1.bf16.msra.mxu0 0
    %603 = vmatprep.subr.bf16.mxu0 0
    %604 = vmatpush1.bf16.msra.mxu0 0
    %605 = vmatprep.subr.bf16.mxu0 0
    %606 = vmatpush1.bf16.msra.mxu0 0
    %607 = vmatprep.subr.bf16.mxu0 0
    %608 = vmatpush1.bf16.msra.mxu0 0
    %609 = vmatprep.subr.bf16.mxu0 0
    %610 = vmatpush1.bf16.msra.mxu0 0
    %611 = vmatprep.subr.bf16.mxu0 0
    %612 = vmatpush1.bf16.msra.mxu0 0
    %613 = vmatprep.mubr.bf16.mxu0 0
    %614 = vmatmul.mubr.bf16.gmra.mrb[0].mxu0 %v539
    %v615 = vpop.f32.mrb[0].mxu0
    %v616 = vadd.f32 %v537, %v615
    %v617 = vpop.f32.mrb[0].mxu0
    %v618 = vadd.f32 %v538, %v617
    %v619 = vpop.f32.mrb[0].mxu0
    %v620 = vpop.f32.mrb[0].mxu0
    %621 = vdwg.mxu0
    %v622 = vxor.u32 %v575, 2147483648
    %v623 = vxor.u32 %v577, 2147483648
    %v624 = vxor.u32 %v618, 2147483648
    %v625 = vmul.f32 %v622, 1.442695
    %v626 = vpow.pop %v625
    %v627 = vmul.f32 %v623, 1.442695
    %v628 = vpow.pop %v627
    %v629 = vmul.f32 %v624, 1.442695
    %v630 = vpow.pop %v629
    %v631 = vadd.f32 %v626, 1.0
    %v632 = vadd.f32 %v628, 1.0
    %v633 = vadd.f32 %v630, 1.0
    %v634 = vrcp.pop %v631
    %v635 = vmul.f32 1.0, %v634
    %v636 = vrcp.pop %v632
    %v637 = vmul.f32 1.0, %v636
    %v638 = vrcp.pop %v633
    %v639 = vmul.f32 1.0, %v638
    %v640 = vtanh.pop %v616
    %v641 = vmul.f32 %v637, %v524
    %v642 = vmul.f32 %v635, %v640
    %v643 = vadd.f32 %v641, %v642
    %v644 = vtanh.pop %v643
    %v645 = vmul.f32 %v639, %v644
    %646 = vset.pattern.permute.xlu0 3
    %647 = vperm.xlu0 %646, %v54
    %v648 = vpop.permute.xlu0 %647
    %v650 = vmul.f32 %v648, %v64
    %v651 = vmul.f32 %v648, %v68
    %v652 = vmul.f32 %v648, %v72
    %v653 = vmul.f32 %v648, %v76
    %v654 = vadd.f32 %v650, %v89
    %v655 = vadd.f32 %v651, %v93
    %v656 = vadd.f32 %v652, %v97
    %v657 = vadd.f32 %v653, %v101
    %v658 = vpack.c.bf16 %v645, %v645
    %659 = vmatprep.subr.bf16.mxu0 %v239
    %660 = vmatpush1.bf16.msra.mxu0 %v238
    %661 = vmatprep.subr.bf16.mxu0 %v243
    %662 = vmatpush1.bf16.msra.mxu0 %v242
    %663 = vmatprep.subr.bf16.mxu0 %v247
    %664 = vmatpush1.bf16.msra.mxu0 %v246
    %665 = vmatprep.subr.bf16.mxu0 %v251
    %666 = vmatpush1.bf16.msra.mxu0 %v250
    %667 = vmatprep.subr.bf16.mxu0 %v255
    %668 = vmatpush1.bf16.msra.mxu0 %v254
    %669 = vmatprep.subr.bf16.mxu0 %v259
    %670 = vmatpush1.bf16.msra.mxu0 %v258
    %671 = vmatprep.subr.bf16.mxu0 %v263
    %672 = vmatpush1.bf16.msra.mxu0 %v262
    %673 = vmatprep.subr.bf16.mxu0 %v267
    %674 = vmatpush1.bf16.msra.mxu0 %v266
    %675 = vmatprep.subr.bf16.mxu0 0
    %676 = vmatpush1.bf16.msra.mxu0 0
    %677 = vmatprep.subr.bf16.mxu0 0
    %678 = vmatpush1.bf16.msra.mxu0 0
    %679 = vmatprep.subr.bf16.mxu0 0
    %680 = vmatpush1.bf16.msra.mxu0 0
    %681 = vmatprep.subr.bf16.mxu0 0
    %682 = vmatpush1.bf16.msra.mxu0 0
    %683 = vmatprep.subr.bf16.mxu0 0
    %684 = vmatpush1.bf16.msra.mxu0 0
    %685 = vmatprep.subr.bf16.mxu0 0
    %686 = vmatpush1.bf16.msra.mxu0 0
    %687 = vmatprep.subr.bf16.mxu0 0
    %688 = vmatpush1.bf16.msra.mxu0 0
    %689 = vmatprep.subr.bf16.mxu0 0
    %690 = vmatpush1.bf16.msra.mxu0 0
    %691 = vmatprep.mubr.bf16.mxu0 0
    %692 = vmatmul.mubr.bf16.gmra.mrb[0].mxu0 %v658
    %v693 = vpop.f32.mrb[0].mxu0
    %v694 = vadd.f32 %v654, %v693
    %v695 = vpop.f32.mrb[0].mxu0
    %v696 = vadd.f32 %v655, %v695
    %v697 = vpop.f32.mrb[0].mxu0
    %v698 = vpop.f32.mrb[0].mxu0
    %699 = vdwg.mxu0
    %700 = vmatprep.subr.bf16.mxu0 %v241
    %701 = vmatpush1.bf16.msra.mxu0 %v240
    %702 = vmatprep.subr.bf16.mxu0 %v245
    %703 = vmatpush1.bf16.msra.mxu0 %v244
    %704 = vmatprep.subr.bf16.mxu0 %v249
    %705 = vmatpush1.bf16.msra.mxu0 %v248
    %706 = vmatprep.subr.bf16.mxu0 %v253
    %707 = vmatpush1.bf16.msra.mxu0 %v252
    %708 = vmatprep.subr.bf16.mxu0 %v257
    %709 = vmatpush1.bf16.msra.mxu0 %v256
    %710 = vmatprep.subr.bf16.mxu0 %v261
    %711 = vmatpush1.bf16.msra.mxu0 %v260
    %712 = vmatprep.subr.bf16.mxu0 %v265
    %713 = vmatpush1.bf16.msra.mxu0 %v264
    %714 = vmatprep.subr.bf16.mxu0 %v269
    %715 = vmatpush1.bf16.msra.mxu0 %v268
    %716 = vmatprep.subr.bf16.mxu0 0
    %717 = vmatpush1.bf16.msra.mxu0 0
    %718 = vmatprep.subr.bf16.mxu0 0
    %719 = vmatpush1.bf16.msra.mxu0 0
    %720 = vmatprep.subr.bf16.mxu0 0
    %721 = vmatpush1.bf16.msra.mxu0 0
    %722 = vmatprep.subr.bf16.mxu0 0
    %723 = vmatpush1.bf16.msra.mxu0 0
    %724 = vmatprep.subr.bf16.mxu0 0
    %725 = vmatpush1.bf16.msra.mxu0 0
    %726 = vmatprep.subr.bf16.mxu0 0
    %727 = vmatpush1.bf16.msra.mxu0 0
    %728 = vmatprep.subr.bf16.mxu0 0
    %729 = vmatpush1.bf16.msra.mxu0 0
    %730 = vmatprep.subr.bf16.mxu0 0
    %731 = vmatpush1.bf16.msra.mxu0 0
    %732 = vmatprep.mubr.bf16.mxu0 0
    %733 = vmatmul.mubr.bf16.gmra.mrb[0].mxu0 %v658
    %v734 = vpop.f32.mrb[0].mxu0
    %v735 = vadd.f32 %v656, %v734
    %v736 = vpop.f32.mrb[0].mxu0
    %v737 = vadd.f32 %v657, %v736
    %v738 = vpop.f32.mrb[0].mxu0
    %v739 = vpop.f32.mrb[0].mxu0
    %740 = vdwg.mxu0
    %v741 = vxor.u32 %v694, 2147483648
    %v742 = vxor.u32 %v696, 2147483648
    %v743 = vxor.u32 %v737, 2147483648
    %v744 = vmul.f32 %v741, 1.442695
    %v745 = vpow.pop %v744
    %v746 = vmul.f32 %v742, 1.442695
    %v747 = vpow.pop %v746
    %v748 = vmul.f32 %v743, 1.442695
    %v749 = vpow.pop %v748
    %v750 = vadd.f32 %v745, 1.0
    %v751 = vadd.f32 %v747, 1.0
    %v752 = vadd.f32 %v749, 1.0
    %v753 = vrcp.pop %v750
    %v754 = vmul.f32 1.0, %v753
    %v755 = vrcp.pop %v751
    %v756 = vmul.f32 1.0, %v755
    %v757 = vrcp.pop %v752
    %v758 = vmul.f32 1.0, %v757
    %v759 = vtanh.pop %v735
    %v760 = vmul.f32 %v756, %v643
    %v761 = vmul.f32 %v754, %v759
    %v762 = vadd.f32 %v760, %v761
    %v763 = vtanh.pop %v762
    %v764 = vmul.f32 %v758, %v763
    %765 = vset.pattern.permute.xlu0 4
    %766 = vperm.xlu0 %765, %v54
    %v767 = vpop.permute.xlu0 %766
    %v769 = vmul.f32 %v767, %v64
    %v770 = vmul.f32 %v767, %v68
    %v771 = vmul.f32 %v767, %v72
    %v772 = vmul.f32 %v767, %v76
    %v773 = vadd.f32 %v769, %v89
    %v774 = vadd.f32 %v770, %v93
    %v775 = vadd.f32 %v771, %v97
    %v776 = vadd.f32 %v772, %v101
    %v777 = vpack.c.bf16 %v764, %v764
    %778 = vmatprep.subr.bf16.mxu0 %v239
    %779 = vmatpush1.bf16.msra.mxu0 %v238
    %780 = vmatprep.subr.bf16.mxu0 %v243
    %781 = vmatpush1.bf16.msra.mxu0 %v242
    %782 = vmatprep.subr.bf16.mxu0 %v247
    %783 = vmatpush1.bf16.msra.mxu0 %v246
    %784 = vmatprep.subr.bf16.mxu0 %v251
    %785 = vmatpush1.bf16.msra.mxu0 %v250
    %786 = vmatprep.subr.bf16.mxu0 %v255
    %787 = vmatpush1.bf16.msra.mxu0 %v254
    %788 = vmatprep.subr.bf16.mxu0 %v259
    %789 = vmatpush1.bf16.msra.mxu0 %v258
    %790 = vmatprep.subr.bf16.mxu0 %v263
    %791 = vmatpush1.bf16.msra.mxu0 %v262
    %792 = vmatprep.subr.bf16.mxu0 %v267
    %793 = vmatpush1.bf16.msra.mxu0 %v266
    %794 = vmatprep.subr.bf16.mxu0 0
    %795 = vmatpush1.bf16.msra.mxu0 0
    %796 = vmatprep.subr.bf16.mxu0 0
    %797 = vmatpush1.bf16.msra.mxu0 0
    %798 = vmatprep.subr.bf16.mxu0 0
    %799 = vmatpush1.bf16.msra.mxu0 0
    %800 = vmatprep.subr.bf16.mxu0 0
    %801 = vmatpush1.bf16.msra.mxu0 0
    %802 = vmatprep.subr.bf16.mxu0 0
    %803 = vmatpush1.bf16.msra.mxu0 0
    %804 = vmatprep.subr.bf16.mxu0 0
    %805 = vmatpush1.bf16.msra.mxu0 0
    %806 = vmatprep.subr.bf16.mxu0 0
    %807 = vmatpush1.bf16.msra.mxu0 0
    %808 = vmatprep.subr.bf16.mxu0 0
    %809 = vmatpush1.bf16.msra.mxu0 0
    %810 = vmatprep.mubr.bf16.mxu0 0
    %811 = vmatmul.mubr.bf16.gmra.mrb[0].mxu0 %v777
    %v812 = vpop.f32.mrb[0].mxu0
    %v813 = vadd.f32 %v773, %v812
    %v814 = vpop.f32.mrb[0].mxu0
    %v815 = vadd.f32 %v774, %v814
    %v816 = vpop.f32.mrb[0].mxu0
    %v817 = vpop.f32.mrb[0].mxu0
    %818 = vdwg.mxu0
    %819 = vmatprep.subr.bf16.mxu0 %v241
    %820 = vmatpush1.bf16.msra.mxu0 %v240
    %821 = vmatprep.subr.bf16.mxu0 %v245
    %822 = vmatpush1.bf16.msra.mxu0 %v244
    %823 = vmatprep.subr.bf16.mxu0 %v249
    %824 = vmatpush1.bf16.msra.mxu0 %v248
    %825 = vmatprep.subr.bf16.mxu0 %v253
    %826 = vmatpush1.bf16.msra.mxu0 %v252
    %827 = vmatprep.subr.bf16.mxu0 %v257
    %828 = vmatpush1.bf16.msra.mxu0 %v256
    %829 = vmatprep.subr.bf16.mxu0 %v261
    %830 = vmatpush1.bf16.msra.mxu0 %v260
    %831 = vmatprep.subr.bf16.mxu0 %v265
    %832 = vmatpush1.bf16.msra.mxu0 %v264
    %833 = vmatprep.subr.bf16.mxu0 %v269
    %834 = vmatpush1.bf16.msra.mxu0 %v268
    %835 = vmatprep.subr.bf16.mxu0 0
    %836 = vmatpush1.bf16.msra.mxu0 0
    %837 = vmatprep.subr.bf16.mxu0 0
    %838 = vmatpush1.bf16.msra.mxu0 0
    %839 = vmatprep.subr.bf16.mxu0 0
    %840 = vmatpush1.bf16.msra.mxu0 0
    %841 = vmatprep.subr.bf16.mxu0 0
    %842 = vmatpush1.bf16.msra.mxu0 0
    %843 = vmatprep.subr.bf16.mxu0 0
    %844 = vmatpush1.bf16.msra.mxu0 0
    %845 = vmatprep.subr.bf16.mxu0 0
    %846 = vmatpush1.bf16.msra.mxu0 0
    %847 = vmatprep.subr.bf16.mxu0 0
    %848 = vmatpush1.bf16.msra.mxu0 0
    %849 = vmatprep.subr.bf16.mxu0 0
    %850 = vmatpush1.bf16.msra.mxu0 0
    %851 = vmatprep.mubr.bf16.mxu0 0
    %852 = vmatmul.mubr.bf16.gmra.mrb[0].mxu0 %v777
    %v853 = vpop.f32.mrb[0].mxu0
    %v854 = vadd.f32 %v775, %v853
    %v855 = vpop.f32.mrb[0].mxu0
    %v856 = vadd.f32 %v776, %v855
    %v857 = vpop.f32.mrb[0].mxu0
    %v858 = vpop.f32.mrb[0].mxu0
    %859 = vdwg.mxu0
    %v860 = vxor.u32 %v813, 2147483648
    %v861 = vxor.u32 %v815, 2147483648
    %v862 = vxor.u32 %v856, 2147483648
    %v863 = vmul.f32 %v860, 1.442695
    %v864 = vpow.pop %v863
    %v865 = vmul.f32 %v861, 1.442695
    %v866 = vpow.pop %v865
    %v867 = vmul.f32 %v862, 1.442695
    %v868 = vpow.pop %v867
    %v869 = vadd.f32 %v864, 1.0
    %v870 = vadd.f32 %v866, 1.0
    %v871 = vadd.f32 %v868, 1.0
    %v872 = vrcp.pop %v869
    %v873 = vmul.f32 1.0, %v872
    %v874 = vrcp.pop %v870
    %v875 = vmul.f32 1.0, %v874
    %v876 = vrcp.pop %v871
    %v877 = vmul.f32 1.0, %v876
    %v878 = vtanh.pop %v854
    %v879 = vmul.f32 %v875, %v762
    %v880 = vmul.f32 %v873, %v878
    %v881 = vadd.f32 %v879, %v880
    %v882 = vtanh.pop %v881
    %v883 = vmul.f32 %v877, %v882
    %884 = vset.pattern.permute.xlu0 5
    %885 = vperm.xlu0 %884, %v54
    %v886 = vpop.permute.xlu0 %885
    %v888 = vmul.f32 %v886, %v64
    %v889 = vmul.f32 %v886, %v68
    %v890 = vmul.f32 %v886, %v72
    %v891 = vmul.f32 %v886, %v76
    %v892 = vadd.f32 %v888, %v89
    %v893 = vadd.f32 %v889, %v93
    %v894 = vadd.f32 %v890, %v97
    %v895 = vadd.f32 %v891, %v101
    %v896 = vpack.c.bf16 %v883, %v883
    %897 = vmatprep.subr.bf16.mxu0 %v239
    %898 = vmatpush1.bf16.msra.mxu0 %v238
    %899 = vmatprep.subr.bf16.mxu0 %v243
    %900 = vmatpush1.bf16.msra.mxu0 %v242
    %901 = vmatprep.subr.bf16.mxu0 %v247
    %902 = vmatpush1.bf16.msra.mxu0 %v246
    %903 = vmatprep.subr.bf16.mxu0 %v251
    %904 = vmatpush1.bf16.msra.mxu0 %v250
    %905 = vmatprep.subr.bf16.mxu0 %v255
    %906 = vmatpush1.bf16.msra.mxu0 %v254
    %907 = vmatprep.subr.bf16.mxu0 %v259
    %908 = vmatpush1.bf16.msra.mxu0 %v258
    %909 = vmatprep.subr.bf16.mxu0 %v263
    %910 = vmatpush1.bf16.msra.mxu0 %v262
    %911 = vmatprep.subr.bf16.mxu0 %v267
    %912 = vmatpush1.bf16.msra.mxu0 %v266
    %913 = vmatprep.subr.bf16.mxu0 0
    %914 = vmatpush1.bf16.msra.mxu0 0
    %915 = vmatprep.subr.bf16.mxu0 0
    %916 = vmatpush1.bf16.msra.mxu0 0
    %917 = vmatprep.subr.bf16.mxu0 0
    %918 = vmatpush1.bf16.msra.mxu0 0
    %919 = vmatprep.subr.bf16.mxu0 0
    %920 = vmatpush1.bf16.msra.mxu0 0
    %921 = vmatprep.subr.bf16.mxu0 0
    %922 = vmatpush1.bf16.msra.mxu0 0
    %923 = vmatprep.subr.bf16.mxu0 0
    %924 = vmatpush1.bf16.msra.mxu0 0
    %925 = vmatprep.subr.bf16.mxu0 0
    %926 = vmatpush1.bf16.msra.mxu0 0
    %927 = vmatprep.subr.bf16.mxu0 0
    %928 = vmatpush1.bf16.msra.mxu0 0
    %929 = vmatprep.mubr.bf16.mxu0 0
    %930 = vmatmul.mubr.bf16.gmra.mrb[0].mxu0 %v896
    %v931 = vpop.f32.mrb[0].mxu0
    %v932 = vadd.f32 %v892, %v931
    %v933 = vpop.f32.mrb[0].mxu0
    %v934 = vadd.f32 %v893, %v933
    %v935 = vpop.f32.mrb[0].mxu0
    %v936 = vpop.f32.mrb[0].mxu0
    %937 = vdwg.mxu0
    %938 = vmatprep.subr.bf16.mxu0 %v241
    %939 = vmatpush1.bf16.msra.mxu0 %v240
    %940 = vmatprep.subr.bf16.mxu0 %v245
    %941 = vmatpush1.bf16.msra.mxu0 %v244
    %942 = vmatprep.subr.bf16.mxu0 %v249
    %943 = vmatpush1.bf16.msra.mxu0 %v248
    %944 = vmatprep.subr.bf16.mxu0 %v253
    %945 = vmatpush1.bf16.msra.mxu0 %v252
    %946 = vmatprep.subr.bf16.mxu0 %v257
    %947 = vmatpush1.bf16.msra.mxu0 %v256
    %948 = vmatprep.subr.bf16.mxu0 %v261
    %949 = vmatpush1.bf16.msra.mxu0 %v260
    %950 = vmatprep.subr.bf16.mxu0 %v265
    %951 = vmatpush1.bf16.msra.mxu0 %v264
    %952 = vmatprep.subr.bf16.mxu0 %v269
    %953 = vmatpush1.bf16.msra.mxu0 %v268
    %954 = vmatprep.subr.bf16.mxu0 0
    %955 = vmatpush1.bf16.msra.mxu0 0
    %956 = vmatprep.subr.bf16.mxu0 0
    %957 = vmatpush1.bf16.msra.mxu0 0
    %958 = vmatprep.subr.bf16.mxu0 0
    %959 = vmatpush1.bf16.msra.mxu0 0
    %960 = vmatprep.subr.bf16.mxu0 0
    %961 = vmatpush1.bf16.msra.mxu0 0
    %962 = vmatprep.subr.bf16.mxu0 0
    %963 = vmatpush1.bf16.msra.mxu0 0
    %964 = vmatprep.subr.bf16.mxu0 0
    %965 = vmatpush1.bf16.msra.mxu0 0
    %966 = vmatprep.subr.bf16.mxu0 0
    %967 = vmatpush1.bf16.msra.mxu0 0
    %968 = vmatprep.subr.bf16.mxu0 0
    %969 = vmatpush1.bf16.msra.mxu0 0
    %970 = vmatprep.mubr.bf16.mxu0 0
    %971 = vmatmul.mubr.bf16.gmra.mrb[0].mxu0 %v896
    %v972 = vpop.f32.mrb[0].mxu0
    %v973 = vadd.f32 %v894, %v972
    %v974 = vpop.f32.mrb[0].mxu0
    %v975 = vadd.f32 %v895, %v974
    %v976 = vpop.f32.mrb[0].mxu0
    %v977 = vpop.f32.mrb[0].mxu0
    %978 = vdwg.mxu0
    %v979 = vxor.u32 %v932, 2147483648
    %v980 = vxor.u32 %v934, 2147483648
    %v981 = vxor.u32 %v975, 2147483648
    %v982 = vmul.f32 %v979, 1.442695
    %v983 = vpow.pop %v982
    %v984 = vmul.f32 %v980, 1.442695
    %v985 = vpow.pop %v984
    %v986 = vmul.f32 %v981, 1.442695
    %v987 = vpow.pop %v986
    %v988 = vadd.f32 %v983, 1.0
    %v989 = vadd.f32 %v985, 1.0
    %v990 = vadd.f32 %v987, 1.0
    %v991 = vrcp.pop %v988
    %v992 = vmul.f32 1.0, %v991
    %v993 = vrcp.pop %v989
    %v994 = vmul.f32 1.0, %v993
    %v995 = vrcp.pop %v990
    %v996 = vmul.f32 1.0, %v995
    %v997 = vtanh.pop %v973
    %v998 = vmul.f32 %v994, %v881
    %v999 = vmul.f32 %v992, %v997
    %v1000 = vadd.f32 %v998, %v999
    %v1001 = vtanh.pop %v1000
    %v1002 = vmul.f32 %v996, %v1001
    %1003 = vset.pattern.permute.xlu0 6
    %1004 = vperm.xlu0 %1003, %v54
    %v1005 = vpop.permute.xlu0 %1004
    %v1007 = vmul.f32 %v1005, %v64
    %v1008 = vmul.f32 %v1005, %v68
    %v1009 = vmul.f32 %v1005, %v72
    %v1010 = vmul.f32 %v1005, %v76
    %v1011 = vadd.f32 %v1007, %v89
    %v1012 = vadd.f32 %v1008, %v93
    %v1013 = vadd.f32 %v1009, %v97
    %v1014 = vadd.f32 %v1010, %v101
    %v1015 = vpack.c.bf16 %v1002, %v1002
    %1016 = vmatprep.subr.bf16.mxu0 %v239
    %1017 = vmatpush1.bf16.msra.mxu0 %v238
    %1018 = vmatprep.subr.bf16.mxu0 %v243
    %1019 = vmatpush1.bf16.msra.mxu0 %v242
    %1020 = vmatprep.subr.bf16.mxu0 %v247
    %1021 = vmatpush1.bf16.msra.mxu0 %v246
    %1022 = vmatprep.subr.bf16.mxu0 %v251
    %1023 = vmatpush1.bf16.msra.mxu0 %v250
    %1024 = vmatprep.subr.bf16.mxu0 %v255
    %1025 = vmatpush1.bf16.msra.mxu0 %v254
    %1026 = vmatprep.subr.bf16.mxu0 %v259
    %1027 = vmatpush1.bf16.msra.mxu0 %v258
    %1028 = vmatprep.subr.bf16.mxu0 %v263
    %1029 = vmatpush1.bf16.msra.mxu0 %v262
    %1030 = vmatprep.subr.bf16.mxu0 %v267
    %1031 = vmatpush1.bf16.msra.mxu0 %v266
    %1032 = vmatprep.subr.bf16.mxu0 0
    %1033 = vmatpush1.bf16.msra.mxu0 0
    %1034 = vmatprep.subr.bf16.mxu0 0
    %1035 = vmatpush1.bf16.msra.mxu0 0
    %1036 = vmatprep.subr.bf16.mxu0 0
    %1037 = vmatpush1.bf16.msra.mxu0 0
    %1038 = vmatprep.subr.bf16.mxu0 0
    %1039 = vmatpush1.bf16.msra.mxu0 0
    %1040 = vmatprep.subr.bf16.mxu0 0
    %1041 = vmatpush1.bf16.msra.mxu0 0
    %1042 = vmatprep.subr.bf16.mxu0 0
    %1043 = vmatpush1.bf16.msra.mxu0 0
    %1044 = vmatprep.subr.bf16.mxu0 0
    %1045 = vmatpush1.bf16.msra.mxu0 0
    %1046 = vmatprep.subr.bf16.mxu0 0
    %1047 = vmatpush1.bf16.msra.mxu0 0
    %1048 = vmatprep.mubr.bf16.mxu0 0
    %1049 = vmatmul.mubr.bf16.gmra.mrb[0].mxu0 %v1015
    %v1050 = vpop.f32.mrb[0].mxu0
    %v1051 = vadd.f32 %v1011, %v1050
    %v1052 = vpop.f32.mrb[0].mxu0
    %v1053 = vadd.f32 %v1012, %v1052
    %v1054 = vpop.f32.mrb[0].mxu0
    %v1055 = vpop.f32.mrb[0].mxu0
    %1056 = vdwg.mxu0
    %1057 = vmatprep.subr.bf16.mxu0 %v241
    %1058 = vmatpush1.bf16.msra.mxu0 %v240
    %1059 = vmatprep.subr.bf16.mxu0 %v245
    %1060 = vmatpush1.bf16.msra.mxu0 %v244
    %1061 = vmatprep.subr.bf16.mxu0 %v249
    %1062 = vmatpush1.bf16.msra.mxu0 %v248
    %1063 = vmatprep.subr.bf16.mxu0 %v253
    %1064 = vmatpush1.bf16.msra.mxu0 %v252
    %1065 = vmatprep.subr.bf16.mxu0 %v257
    %1066 = vmatpush1.bf16.msra.mxu0 %v256
    %1067 = vmatprep.subr.bf16.mxu0 %v261
    %1068 = vmatpush1.bf16.msra.mxu0 %v260
    %1069 = vmatprep.subr.bf16.mxu0 %v265
    %1070 = vmatpush1.bf16.msra.mxu0 %v264
    %1071 = vmatprep.subr.bf16.mxu0 %v269
    %1072 = vmatpush1.bf16.msra.mxu0 %v268
    %1073 = vmatprep.subr.bf16.mxu0 0
    %1074 = vmatpush1.bf16.msra.mxu0 0
    %1075 = vmatprep.subr.bf16.mxu0 0
    %1076 = vmatpush1.bf16.msra.mxu0 0
    %1077 = vmatprep.subr.bf16.mxu0 0
    %1078 = vmatpush1.bf16.msra.mxu0 0
    %1079 = vmatprep.subr.bf16.mxu0 0
    %1080 = vmatpush1.bf16.msra.mxu0 0
    %1081 = vmatprep.subr.bf16.mxu0 0
    %1082 = vmatpush1.bf16.msra.mxu0 0
    %1083 = vmatprep.subr.bf16.mxu0 0
    %1084 = vmatpush1.bf16.msra.mxu0 0
    %1085 = vmatprep.subr.bf16.mxu0 0
    %1086 = vmatpush1.bf16.msra.mxu0 0
    %1087 = vmatprep.subr.bf16.mxu0 0
    %1088 = vmatpush1.bf16.msra.mxu0 0
    %1089 = vmatprep.mubr.bf16.mxu0 0
    %1090 = vmatmul.mubr.bf16.gmra.mrb[0].mxu0 %v1015
    %v1091 = vpop.f32.mrb[0].mxu0
    %v1092 = vadd.f32 %v1013, %v1091
    %v1093 = vpop.f32.mrb[0].mxu0
    %v1094 = vadd.f32 %v1014, %v1093
    %v1095 = vpop.f32.mrb[0].mxu0
    %v1096 = vpop.f32.mrb[0].mxu0
    %1097 = vdwg.mxu0
    %v1098 = vxor.u32 %v1051, 2147483648
    %v1099 = vxor.u32 %v1053, 2147483648
    %v1100 = vxor.u32 %v1094, 2147483648
    %v1101 = vmul.f32 %v1098, 1.442695
    %v1102 = vpow.pop %v1101
    %v1103 = vmul.f32 %v1099, 1.442695
    %v1104 = vpow.pop %v1103
    %v1105 = vmul.f32 %v1100, 1.442695
    %v1106 = vpow.pop %v1105
    %v1107 = vadd.f32 %v1102, 1.0
    %v1108 = vadd.f32 %v1104, 1.0
    %v1109 = vadd.f32 %v1106, 1.0
    %v1110 = vrcp.pop %v1107
    %v1111 = vmul.f32 1.0, %v1110
    %v1112 = vrcp.pop %v1108
    %v1113 = vmul.f32 1.0, %v1112
    %v1114 = vrcp.pop %v1109
    %v1115 = vmul.f32 1.0, %v1114
    %v1116 = vtanh.pop %v1092
    %v1117 = vmul.f32 %v1113, %v1000
    %v1118 = vmul.f32 %v1111, %v1116
    %v1119 = vadd.f32 %v1117, %v1118
    %v1120 = vtanh.pop %v1119
    %v1121 = vmul.f32 %v1115, %v1120
    %1122 = vset.pattern.permute.xlu0 7
    %1123 = vperm.xlu0 %1122, %v54
    %v1124 = vpop.permute.xlu0 %1123
    %v1126 = vmul.f32 %v1124, %v64
    %v1127 = vmul.f32 %v1124, %v68
    %v1128 = vmul.f32 %v1124, %v72
    %v1129 = vmul.f32 %v1124, %v76
    %v1130 = vadd.f32 %v1126, %v89
    %v1131 = vadd.f32 %v1127, %v93
    %v1132 = vadd.f32 %v1128, %v97
    %v1133 = vadd.f32 %v1129, %v101
    %v1134 = vpack.c.bf16 %v1121, %v1121
    %1135 = vmatprep.subr.bf16.mxu0 %v239
    %1136 = vmatpush1.bf16.msra.mxu0 %v238
    %1137 = vmatprep.subr.bf16.mxu0 %v243
    %1138 = vmatpush1.bf16.msra.mxu0 %v242
    %1139 = vmatprep.subr.bf16.mxu0 %v247
    %1140 = vmatpush1.bf16.msra.mxu0 %v246
    %1141 = vmatprep.subr.bf16.mxu0 %v251
    %1142 = vmatpush1.bf16.msra.mxu0 %v250
    %1143 = vmatprep.subr.bf16.mxu0 %v255
    %1144 = vmatpush1.bf16.msra.mxu0 %v254
    %1145 = vmatprep.subr.bf16.mxu0 %v259
    %1146 = vmatpush1.bf16.msra.mxu0 %v258
    %1147 = vmatprep.subr.bf16.mxu0 %v263
    %1148 = vmatpush1.bf16.msra.mxu0 %v262
    %1149 = vmatprep.subr.bf16.mxu0 %v267
    %1150 = vmatpush1.bf16.msra.mxu0 %v266
    %1151 = vmatprep.subr.bf16.mxu0 0
    %1152 = vmatpush1.bf16.msra.mxu0 0
    %1153 = vmatprep.subr.bf16.mxu0 0
    %1154 = vmatpush1.bf16.msra.mxu0 0
    %1155 = vmatprep.subr.bf16.mxu0 0
    %1156 = vmatpush1.bf16.msra.mxu0 0
    %1157 = vmatprep.subr.bf16.mxu0 0
    %1158 = vmatpush1.bf16.msra.mxu0 0
    %1159 = vmatprep.subr.bf16.mxu0 0
    %1160 = vmatpush1.bf16.msra.mxu0 0
    %1161 = vmatprep.subr.bf16.mxu0 0
    %1162 = vmatpush1.bf16.msra.mxu0 0
    %1163 = vmatprep.subr.bf16.mxu0 0
    %1164 = vmatpush1.bf16.msra.mxu0 0
    %1165 = vmatprep.subr.bf16.mxu0 0
    %1166 = vmatpush1.bf16.msra.mxu0 0
    %1167 = vmatprep.mubr.bf16.mxu0 0
    %1168 = vmatmul.mubr.bf16.gmra.mrb[0].mxu0 %v1134
    %v1169 = vpop.f32.mrb[0].mxu0
    %v1170 = vadd.f32 %v1130, %v1169
    %v1171 = vpop.f32.mrb[0].mxu0
    %v1172 = vadd.f32 %v1131, %v1171
    %v1173 = vpop.f32.mrb[0].mxu0
    %v1174 = vpop.f32.mrb[0].mxu0
    %1175 = vdwg.mxu0
    %1176 = vmatprep.subr.bf16.mxu0 %v241
    %1177 = vmatpush1.bf16.msra.mxu0 %v240
    %1178 = vmatprep.subr.bf16.mxu0 %v245
    %1179 = vmatpush1.bf16.msra.mxu0 %v244
    %1180 = vmatprep.subr.bf16.mxu0 %v249
    %1181 = vmatpush1.bf16.msra.mxu0 %v248
    %1182 = vmatprep.subr.bf16.mxu0 %v253
    %1183 = vmatpush1.bf16.msra.mxu0 %v252
    %1184 = vmatprep.subr.bf16.mxu0 %v257
    %1185 = vmatpush1.bf16.msra.mxu0 %v256
    %1186 = vmatprep.subr.bf16.mxu0 %v261
    %1187 = vmatpush1.bf16.msra.mxu0 %v260
    %1188 = vmatprep.subr.bf16.mxu0 %v265
    %1189 = vmatpush1.bf16.msra.mxu0 %v264
    %1190 = vmatprep.subr.bf16.mxu0 %v269
    %1191 = vmatpush1.bf16.msra.mxu0 %v268
    %1192 = vmatprep.subr.bf16.mxu0 0
    %1193 = vmatpush1.bf16.msra.mxu0 0
    %1194 = vmatprep.subr.bf16.mxu0 0
    %1195 = vmatpush1.bf16.msra.mxu0 0
    %1196 = vmatprep.subr.bf16.mxu0 0
    %1197 = vmatpush1.bf16.msra.mxu0 0
    %1198 = vmatprep.subr.bf16.mxu0 0
    %1199 = vmatpush1.bf16.msra.mxu0 0
    %1200 = vmatprep.subr.bf16.mxu0 0
    %1201 = vmatpush1.bf16.msra.mxu0 0
    %1202 = vmatprep.subr.bf16.mxu0 0
    %1203 = vmatpush1.bf16.msra.mxu0 0
    %1204 = vmatprep.subr.bf16.mxu0 0
    %1205 = vmatpush1.bf16.msra.mxu0 0
    %1206 = vmatprep.subr.bf16.mxu0 0
    %1207 = vmatpush1.bf16.msra.mxu0 0
    %1208 = vmatprep.mubr.bf16.mxu0 0
    %1209 = vmatmul.mubr.bf16.gmra.mrb[0].mxu0 %v1134
    %v1210 = vpop.f32.mrb[0].mxu0
    %v1211 = vadd.f32 %v1132, %v1210
    %v1212 = vpop.f32.mrb[0].mxu0
    %v1213 = vadd.f32 %v1133, %v1212
    %v1214 = vpop.f32.mrb[0].mxu0
    %v1215 = vpop.f32.mrb[0].mxu0
    %1216 = vdwg.mxu0
    %v1217 = vxor.u32 %v1170, 2147483648
    %v1218 = vxor.u32 %v1172, 2147483648
    %v1219 = vxor.u32 %v1213, 2147483648
    %v1220 = vmul.f32 %v1217, 1.442695
    %v1221 = vpow.pop %v1220
    %v1222 = vmul.f32 %v1218, 1.442695
    %v1223 = vpow.pop %v1222
    %v1224 = vmul.f32 %v1219, 1.442695
    %v1225 = vpow.pop %v1224
    %v1226 = vadd.f32 %v1221, 1.0
    %v1227 = vadd.f32 %v1223, 1.0
    %v1228 = vadd.f32 %v1225, 1.0
    %v1229 = vrcp.pop %v1226
    %v1230 = vmul.f32 1.0, %v1229
    %v1231 = vrcp.pop %v1227
    %v1232 = vmul.f32 1.0, %v1231
    %v1233 = vrcp.pop %v1228
    %v1234 = vmul.f32 1.0, %v1233
    %v1235 = vtanh.pop %v1211
    %v1236 = vmul.f32 %v1232, %v1119
    %v1237 = vmul.f32 %v1230, %v1235
    %v1238 = vadd.f32 %v1236, %v1237
    %v1239 = vtanh.pop %v1238
    %v1240 = vmul.f32 %v1234, %v1239
    %v1241 = vld [vmem:[%s4] sm:$0x1]
    %v1243 = vlaneseq
    %v1244 = vshrl.u32 %v1243, 7
    %v1245 = vsub.s32 0, %v1244
    %v1246 = vrot.slane %v1241, %v1245
    %v1248 = vmul.f32 %v1240, %v1246
    %1249 = vadd.xlane.f32.xlu0 %v1248
    %v1250 = vpop.xlane.xlu0 %1249
    %v1251 = vld [vmem:[#allocation2] sm:$0x1]
    %v1253 = vlaneseq
    %v1254 = vshrl.u32 %v1253, 7
    %v1255 = vsub.s32 0, %v1254
    %v1256 = vrot.slane %v1251, %v1255
    %v1258 = vadd.f32 %v1250, %v1256
    %vm1259 = vcmask 7168
    %1260 = vst.msk [vmem:[%s6] sm:$0xff] %vm1259, %v1258
    // Predicated region
    $region34: #{tpu_custom_call.1} parent=1 // pred_check
      _
    $region35: #{tpu_custom_call.1} parent=1 // pred_check_branch
      %1262 = sbr.rel (0) target = $region37
    $region36: #{tpu_custom_call.1} parent=1 // pred_region
      _
    $region37: #{tpu_custom_call.1} parent=1 // pred_fallthru
      _
    // Predicated region
    $region38: #{tpu_custom_call.1} parent=1 // pred_check
      _
    $region39: #{tpu_custom_call.1} parent=1 // pred_check_branch
      %1264 = sbr.rel (0) target = $region41
    $region40: #{tpu_custom_call.1} parent=1 // pred_region
      _
    $region41: #{tpu_custom_call.1} parent=1 // pred_fallthru
      _
    %1265 = vsyncpa [#allocation4], 1
    %1266 = vsyncpa [#allocation6], 1

</llo_original>
